<compile_context>
chip_gen: v7x
topology: tpu7x:2x2x1
jax: 0.10.0
libtpu: 0.0.40
codegen_flags: <defaults>
</compile_context>

<pallas_src>
import jax
import jax.numpy as jnp
from jax.experimental import pallas as pl
from jax.experimental.pallas import tpu as pltpu

F32 = jnp.float32
LANE = 128


# ------------------------------ small helpers ------------------------------ #

def _rup(v, m=LANE):
    return ((v + m - 1) // m) * m


def _pad_to(a, shape):
    return jnp.pad(a, [(0, t - s) for s, t in zip(a.shape, shape)])


def _pick_tb(n, pref, mult):
    """Largest row-block <= pref that divides n and is a multiple of mult (else n)."""
    tb = min(pref, n)
    tb -= tb % mult
    while tb >= mult:
        if n % tb == 0:
            return tb
        tb -= mult
    return n


def _topk_perm(score, num_graphs, nodes_per_graph, k):
    # Per-graph top-k (descending) -> global node indices (graphs stay contiguous).
    s = score.reshape(num_graphs, nodes_per_graph)
    local = jnp.argsort(-s, axis=1)[:, :k]
    offs = (jnp.arange(num_graphs) * nodes_per_graph)[:, None]
    return (local + offs).reshape(-1)


# ----------------------------- fused kernel A ------------------------------ #
# GCNConv (add_self_loops, sym-norm) -> BatchNorm(eval) -> LeakyReLU(0.01)
# -> [dropout = identity] -> lin1 -> TopKPooling score (tanh) -> gating.
# Tiled over target-node row blocks; each step consumes one adjacency row block.

def _gcn_bn_lin_score_kernel(adj_ref, x_ref, dinv_ref, wg_ref, bg_ref,
                             gamma_ref, beta_ref, mean_ref, var_ref,
                             w1_ref, b1_ref, p1w_ref,
                             xo_ref, so_ref):
    tb = adj_ref.shape[0]
    i0 = pl.multiple_of(pl.program_id(0) * tb, tb)

    # out = D^-1/2 (A + I) D^-1/2 X W + b, computed per row block as
    #       dinv_blk * ((adj_blk @ (dinv*X) + dinv_blk * X_blk) @ W) + b
    xs = (dinv_ref[...] * x_ref[...]).astype(jnp.bfloat16)        # D^-1/2 X  (full, bf16 MXU)
    x_blk = x_ref[pl.ds(i0, tb), :]
    dinv_blk = dinv_ref[pl.ds(i0, tb), :]
    neigh = jnp.dot(adj_ref[...], xs, preferred_element_type=jnp.float32)
    h = neigh + dinv_blk * x_blk                                  # self-loop folded in
    g = dinv_blk * jnp.dot(h, wg_ref[...], preferred_element_type=jnp.float32) + bg_ref[...]

    # BatchNorm (running stats) + LeakyReLU(0.01); dropout(p=0.5) is identity in eval.
    xn = (g - mean_ref[...]) * jax.lax.rsqrt(var_ref[...] + 1e-5)
    y = xn * gamma_ref[...] + beta_ref[...]
    y = jnp.where(y > 0, y, 0.01 * y)

    # lin1
    h1 = jnp.dot(y, w1_ref[...], preferred_element_type=jnp.float32) + b1_ref[...]

    # TopKPooling score tanh((h1 . w)/||w||)  -- MXU [H,1] contraction, EUP rsqrt.
    w = p1w_ref[...]
    inv_norm = jax.lax.rsqrt(jnp.sum(w * w, keepdims=True))
    s = jnp.tanh(jnp.dot(h1, w, preferred_element_type=jnp.float32) * inv_norm)

    xo_ref[...] = h1 * s        # gating commutes with the later row gather
    so_ref[...] = s


# ----------------------------- fused kernel B ------------------------------ #
# GATv2Conv (heads=1, add_self_loops, neg_slope=0.2) -> LeakyReLU(0.01)
# -> TopKPooling score (tanh) -> gating.  Tiled over target-row blocks so only a
# [tb, N, H] attention slab is live per step (row-block tiling).

def _gatv2_score_kernel(adj_ref, x_ref, wl_ref, wr_ref, att_ref, b_ref, p2w_ref,
                        xo_ref, so_ref):
    tb, nsrc = adj_ref.shape
    i0 = pl.multiple_of(pl.program_id(0) * tb, tb)

    x_all = x_ref[...]
    # TODO(synk): for large graphs hoist the full source transform xl into its own
    # pipelined pass instead of recomputing it per row block.
    xl = jnp.dot(x_all, wl_ref[...], preferred_element_type=jnp.float32)       # sources
    xr = jnp.dot(x_ref[pl.ds(i0, tb), :], wr_ref[...],
                 preferred_element_type=jnp.float32)                           # target block

    # e[a, j] = att . LeakyReLU_0.2(xl[j] + xr[a])
    t = xr[:, None, :] + xl[None, :, :]                                        # [tb, nsrc, H]
    t = jnp.where(t > 0, t, 0.2 * t)
    e = jnp.sum(t * att_ref[...][None, :, :], axis=-1)                         # [tb, nsrc]

    # adjacency rows for this block + self loops on the (global) diagonal
    r = jax.lax.broadcasted_iota(jnp.int32, (tb, nsrc), 0) + i0
    c = jax.lax.broadcasted_iota(jnp.int32, (tb, nsrc), 1)
    mask = jnp.maximum(adj_ref[...], (r == c).astype(jnp.float32))

    logits = jnp.where(mask > 0, e, -1e30)
    m = jnp.max(logits, axis=1, keepdims=True)
    p = jnp.exp(logits - m) * mask
    alpha = p * pl.reciprocal(jnp.sum(p, axis=1, keepdims=True), approx=True)

    o = jnp.dot(alpha, xl, preferred_element_type=jnp.float32) + b_ref[...]
    o = jnp.where(o > 0, o, 0.01 * o)                                          # act2

    w = p2w_ref[...]
    inv_norm = jax.lax.rsqrt(jnp.sum(w * w, keepdims=True))
    s = jnp.tanh(jnp.dot(o, w, preferred_element_type=jnp.float32) * inv_norm)

    xo_ref[...] = o * s
    so_ref[...] = s


# ----------------------------- fused kernel C ------------------------------ #
# lin2 -> global_add_pool -> lin3 for contiguous equal-sized graphs, using
# sum_k(lin2(x_k)) == (sum_k x_k) @ W2 + k*b2   (exact).

def _lin_pool_lin_kernel(x_ref, w2_ref, b2_ref, w3_ref, b3_ref, o_ref):
    k = x_ref.shape[1]
    pooled = jnp.sum(x_ref[...], axis=1)                                       # [G, H]
    h = jnp.dot(pooled, w2_ref[...], preferred_element_type=jnp.float32) + k * b2_ref[...]
    o_ref[...] = jnp.dot(h, w3_ref[...], preferred_element_type=jnp.float32) + b3_ref[...]


# ------------------------------- forward pass ------------------------------ #

def agnn_efg_forward(params, x, adj, batch, num_graphs):
    del batch  # graphs are contiguous & equal-sized; derived from shapes below
    n, f_in = x.shape
    hidden = params["lin1_w"].shape[0]
    out_dim = params["lin3_w"].shape[1]
    npg = n // num_graphs

    fp, hp, op = _rup(f_in), _rup(hidden), _rup(out_dim)

    # Pad every feature dim to the 128-lane width (zero padding is exact here).
    xp = _pad_to(x, (n, fp))
    wg, bg = _pad_to(params["gcn_w"], (fp, hp)), _pad_to(params["gcn_b"], (1, hp))
    gam, bet = _pad_to(params["bn_gamma"], (1, hp)), _pad_to(params["bn_beta"], (1, hp))
    mu, var = _pad_to(params["bn_mean"], (1, hp)), _pad_to(params["bn_var"], (1, hp))
    w1, b1 = _pad_to(params["lin1_w"], (hp, hp)), _pad_to(params["lin1_b"], (1, hp))
    p1w = _pad_to(params["pool1_w"], (hp, 1))
    wl, wr = _pad_to(params["gat_wl"], (hp, hp)), _pad_to(params["gat_wr"], (hp, hp))
    att, bga = _pad_to(params["gat_att"], (1, hp)), _pad_to(params["gat_b"], (1, hp))
    p2w = _pad_to(params["pool2_w"], (hp, 1))
    w2, b2 = _pad_to(params["lin2_w"], (hp, hp)), _pad_to(params["lin2_b"], (1, hp))
    w3, b3 = _pad_to(params["lin3_w"], (hp, op)), _pad_to(params["lin3_b"], (1, op))

    # D^{-1/2} with implicit self loop (adj stores no self loops) — one cheap reduction.
    dinv = jax.lax.rsqrt(jnp.sum(adj, axis=1, keepdims=True) + 1.0)
    adj_bf = adj.astype(jnp.bfloat16)            # 0/1 exact; halves adjacency HBM traffic

    const2 = lambda i: (0, 0)

    # ---- kernel A: GCN + BN + LeakyReLU + lin1 + TopK score/gate (row-block grid) ----
    # Row-block target kept small so the demo exercises a multi-step grid;
    # raise towards 256-512 rows (VMEM-budgeted) for realistic N.
    tba = _pick_tb(n, 16, 16)
    x1s, score1 = pl.pallas_call(
        _gcn_bn_lin_score_kernel,
        grid=(n // tba,),
        in_specs=[
            pl.BlockSpec((tba, n), lambda i: (i, 0)),    # adjacency row block (bf16)
            pl.BlockSpec((n, fp), const2),               # x (full, resident)
            pl.BlockSpec((n, 1), const2),                # dinv (full)
            pl.BlockSpec((fp, hp), const2),              # gcn W
            pl.BlockSpec((1, hp), const2),               # gcn b
            pl.BlockSpec((1, hp), const2),               # bn gamma
            pl.BlockSpec((1, hp), const2),               # bn beta
            pl.BlockSpec((1, hp), const2),               # bn mean
            pl.BlockSpec((1, hp), const2),               # bn var
            pl.BlockSpec((hp, hp), const2),              # lin1 W
            pl.BlockSpec((1, hp), const2),               # lin1 b
            pl.BlockSpec((hp, 1), const2),               # pool1 weight
        ],
        out_specs=(pl.BlockSpec((tba, hp), lambda i: (i, 0)),
                   pl.BlockSpec((tba, 1), lambda i: (i, 0))),
        out_shape=(jax.ShapeDtypeStruct((n, hp), F32),
                   jax.ShapeDtypeStruct((n, 1), F32)),
        compiler_params=pltpu.CompilerParams(dimension_semantics=("parallel",)),
    )(adj_bf, xp, dinv, wg, bg, gam, bet, mu, var, w1, b1, p1w)

    # ---- pool1: per-graph top-k selection (argsort + gathers stay as XLA glue) ----
    k1 = (npg + 1) // 2
    perm1 = _topk_perm(score1[:, 0], num_graphs, npg, k1)
    xg = x1s[perm1]                              # rows already gated by tanh(score)
    adjp = adj[perm1][:, perm1]                  # TODO(synk): gather at DMA time via scalar prefetch
    n1, npg1 = num_graphs * k1, k1

    # ---- kernel B: GATv2 + LeakyReLU + TopK score/gate (row-block grid) ----
    tbb = _pick_tb(n1, 8, 8)
    x2s, score2 = pl.pallas_call(
        _gatv2_score_kernel,
        grid=(n1 // tbb,),
        in_specs=[
            pl.BlockSpec((tbb, n1), lambda i: (i, 0)),   # pooled adjacency row block
            pl.BlockSpec((n1, hp), const2),              # gated node features (full)
            pl.BlockSpec((hp, hp), const2),              # lin_l
            pl.BlockSpec((hp, hp), const2),              # lin_r
            pl.BlockSpec((1, hp), const2),               # att
            pl.BlockSpec((1, hp), const2),               # gat bias
            pl.BlockSpec((hp, 1), const2),               # pool2 weight
        ],
        out_specs=(pl.BlockSpec((tbb, hp), lambda i: (i, 0)),
                   pl.BlockSpec((tbb, 1), lambda i: (i, 0))),
        out_shape=(jax.ShapeDtypeStruct((n1, hp), F32),
                   jax.ShapeDtypeStruct((n1, 1), F32)),
        compiler_params=pltpu.CompilerParams(dimension_semantics=("parallel",)),
    )(adjp, xg, wl, wr, att, bga, p2w)

    # ---- pool2 selection, then kernel C: lin2 + global_add_pool + lin3 ----
    k2 = (npg1 + 1) // 2
    perm2 = _topk_perm(score2[:, 0], num_graphs, npg1, k2)
    x3 = x2s[perm2].reshape(num_graphs, k2, hp)  # contiguous equal-sized graphs

    out_pad = pl.pallas_call(
        _lin_pool_lin_kernel,
        in_specs=[pl.BlockSpec(memory_space=pltpu.MemorySpace.VMEM)] * 5,
        out_specs=pl.BlockSpec(memory_space=pltpu.MemorySpace.VMEM),
        out_shape=jax.ShapeDtypeStruct((num_graphs, op), F32),
    )(x3, w2, b2, w3, b3)

    return out_pad[:, :out_dim]


# --------------------------------- params ---------------------------------- #

def init_params(key, f_in, hidden, out):
    ks = jax.random.split(key, 14)
    g = lambda k, shape: jax.random.normal(k, shape, F32) * 0.1
    return dict(
        gcn_w=g(ks[0], (f_in, hidden)),    gcn_b=g(ks[1], (1, hidden)),
        bn_gamma=jnp.ones((1, hidden), F32), bn_beta=jnp.zeros((1, hidden), F32),
        bn_mean=jnp.zeros((1, hidden), F32), bn_var=jnp.ones((1, hidden), F32),
        lin1_w=g(ks[2], (hidden, hidden)), lin1_b=g(ks[3], (1, hidden)),
        pool1_w=g(ks[4], (hidden, 1)),
        gat_wl=g(ks[5], (hidden, hidden)), gat_wr=g(ks[6], (hidden, hidden)),
        gat_att=g(ks[7], (1, hidden)),     gat_b=g(ks[8], (1, hidden)),
        pool2_w=g(ks[9], (hidden, 1)),
        lin2_w=g(ks[10], (hidden, hidden)), lin2_b=g(ks[11], (1, hidden)),
        lin3_w=g(ks[12], (hidden, out)),    lin3_b=g(ks[13], (1, out)),
    )


if __name__ == "__main__":
    NUM_GRAPHS, NPG, F_IN, HIDDEN, OUT = 2, 16, 16, 32, 4
    N = NUM_GRAPHS * NPG

    key = jax.random.PRNGKey(0)
    k_x, k_adj, k_p = jax.random.split(key, 3)

    x = jax.random.normal(k_x, (N, F_IN), F32)

    # block-diagonal undirected adjacency (no self loops), edges only within a graph
    blocks = jax.random.bernoulli(k_adj, 0.4, (NUM_GRAPHS, NPG, NPG)).astype(F32)
    blocks = jnp.triu(blocks, k=1)
    blocks = blocks + jnp.swapaxes(blocks, 1, 2)
    adj = jax.scipy.linalg.block_diag(*[blocks[g] for g in range(NUM_GRAPHS)])
    batch = jnp.repeat(jnp.arange(NUM_GRAPHS, dtype=jnp.int32), NPG)

    params = init_params(k_p, F_IN, HIDDEN, OUT)

    fwd = jax.jit(agnn_efg_forward, static_argnums=(4,))
    out = fwd(params, x, adj, batch, NUM_GRAPHS)
    out = jax.block_until_ready(out)
    assert out.shape == (NUM_GRAPHS, OUT) and out.dtype == F32
    print("KERNEL_OK")
</pallas_src>

<mosaic_0001>
module attributes {stable_mosaic.version = 11 : i64} {
  func.func @_gcn_bn_lin_score_kernel(%arg0: i32, %arg1: memref<16x32xbf16, #tpu.memory_space<vmem>>, %arg2: memref<32x128xf32, #tpu.memory_space<vmem>>, %arg3: memref<32x1xf32, #tpu.memory_space<vmem>>, %arg4: memref<128x128xf32, #tpu.memory_space<vmem>>, %arg5: memref<1x128xf32, #tpu.memory_space<vmem>>, %arg6: memref<1x128xf32, #tpu.memory_space<vmem>>, %arg7: memref<1x128xf32, #tpu.memory_space<vmem>>, %arg8: memref<1x128xf32, #tpu.memory_space<vmem>>, %arg9: memref<1x128xf32, #tpu.memory_space<vmem>>, %arg10: memref<128x128xf32, #tpu.memory_space<vmem>>, %arg11: memref<1x128xf32, #tpu.memory_space<vmem>>, %arg12: memref<128x1xf32, #tpu.memory_space<vmem>>, %arg13: memref<16x128xf32, #tpu.memory_space<vmem>>, %arg14: memref<16x1xf32, #tpu.memory_space<vmem>>) attributes {dimension_semantics = [#tpu.dimension_semantics<parallel>], iteration_bounds = array<i64: 2>, scalar_prefetch = 0 : i64, scratch_operands = 0 : i64, tpu.core_type = #tpu.core_type<tc>, window_params = [{transform_indices = @transform_0, window_bounds = array<i64: 16, 32>}, {pipeline_mode = #tpu.pipeline_mode<synchronous>, transform_indices = @transform_1, window_bounds = array<i64: 32, 128>}, {pipeline_mode = #tpu.pipeline_mode<synchronous>, transform_indices = @transform_2, window_bounds = array<i64: 32, 1>}, {pipeline_mode = #tpu.pipeline_mode<synchronous>, transform_indices = @transform_3, window_bounds = array<i64: 128, 128>}, {pipeline_mode = #tpu.pipeline_mode<synchronous>, transform_indices = @transform_4, window_bounds = array<i64: 1, 128>}, {pipeline_mode = #tpu.pipeline_mode<synchronous>, transform_indices = @transform_5, window_bounds = array<i64: 1, 128>}, {pipeline_mode = #tpu.pipeline_mode<synchronous>, transform_indices = @transform_6, window_bounds = array<i64: 1, 128>}, {pipeline_mode = #tpu.pipeline_mode<synchronous>, transform_indices = @transform_7, window_bounds = array<i64: 1, 128>}, {pipeline_mode = #tpu.pipeline_mode<synchronous>, transform_indices = @transform_8, window_bounds = array<i64: 1, 128>}, {pipeline_mode = #tpu.pipeline_mode<synchronous>, transform_indices = @transform_9, window_bounds = array<i64: 128, 128>}, {pipeline_mode = #tpu.pipeline_mode<synchronous>, transform_indices = @transform_10, window_bounds = array<i64: 1, 128>}, {pipeline_mode = #tpu.pipeline_mode<synchronous>, transform_indices = @transform_11, window_bounds = array<i64: 128, 1>}, {transform_indices = @transform_12, window_bounds = array<i64: 16, 128>}, {transform_indices = @transform_13, window_bounds = array<i64: 16, 1>}]} {
    %c16_i32 = arith.constant 16 : i32
    %0 = arith.muli %arg0, %c16_i32 : i32
    %1 = tpu.assume_multiple %0, 16 : i32
    %c0 = arith.constant 0 : index
    %c0_0 = arith.constant 0 : index
    %2 = vector.load %arg3[%c0, %c0_0] : memref<32x1xf32, #tpu.memory_space<vmem>>, vector<32x1xf32>
    %c0_1 = arith.constant 0 : index
    %c0_2 = arith.constant 0 : index
    %3 = vector.load %arg2[%c0_1, %c0_2] : memref<32x128xf32, #tpu.memory_space<vmem>>, vector<32x128xf32>
    %4 = vector.broadcast %2 : vector<32x1xf32> to vector<32x128xf32>
    %5 = arith.mulf %4, %3 : vector<32x128xf32>
    %6 = arith.truncf %5 : vector<32x128xf32> to vector<32x128xbf16>
    %7 = arith.index_cast %1 : i32 to index
    %c0_3 = arith.constant 0 : index
    %8 = vector.load %arg2[%7, %c0_3] : memref<32x128xf32, #tpu.memory_space<vmem>>, vector<16x128xf32>
    %9 = arith.index_cast %1 : i32 to index
    %c0_4 = arith.constant 0 : index
    %10 = vector.load %arg3[%9, %c0_4] : memref<32x1xf32, #tpu.memory_space<vmem>>, vector<16x1xf32>
    %c0_5 = arith.constant 0 : index
    %c0_6 = arith.constant 0 : index
    %11 = vector.load %arg1[%c0_5, %c0_6] : memref<16x32xbf16, #tpu.memory_space<vmem>>, vector<16x32xbf16>
    %cst = arith.constant dense<0.000000e+00> : vector<16x128xf32>
    %12 = tpu.matmul %11, %6, %cst {dimension_numbers = #tpu.dot_dimension_numbers<[1], [0], [0], [1], [0, 0, 1, 1], [], []>} : vector<16x32xbf16>, vector<32x128xbf16>, vector<16x128xf32> -> vector<16x128xf32>
    %13 = vector.broadcast %10 : vector<16x1xf32> to vector<16x128xf32>
    %14 = arith.mulf %13, %8 : vector<16x128xf32>
    %15 = arith.addf %12, %14 : vector<16x128xf32>
    %c0_7 = arith.constant 0 : index
    %c0_8 = arith.constant 0 : index
    %16 = vector.load %arg4[%c0_7, %c0_8] : memref<128x128xf32, #tpu.memory_space<vmem>>, vector<128x128xf32>
    %cst_9 = arith.constant dense<0.000000e+00> : vector<16x128xf32>
    %17 = tpu.matmul %15, %16, %cst_9 {dimension_numbers = #tpu.dot_dimension_numbers<[1], [0], [0], [1], [0, 0, 1, 1], [], []>} : vector<16x128xf32>, vector<128x128xf32>, vector<16x128xf32> -> vector<16x128xf32>
    %18 = vector.broadcast %10 : vector<16x1xf32> to vector<16x128xf32>
    %19 = arith.mulf %18, %17 : vector<16x128xf32>
    %c0_10 = arith.constant 0 : index
    %c0_11 = arith.constant 0 : index
    %20 = vector.load %arg5[%c0_10, %c0_11] : memref<1x128xf32, #tpu.memory_space<vmem>>, vector<1x128xf32>
    %21 = vector.broadcast %20 : vector<1x128xf32> to vector<16x128xf32>
    %22 = arith.addf %19, %21 : vector<16x128xf32>
    %c0_12 = arith.constant 0 : index
    %c0_13 = arith.constant 0 : index
    %23 = vector.load %arg8[%c0_12, %c0_13] : memref<1x128xf32, #tpu.memory_space<vmem>>, vector<1x128xf32>
    %24 = vector.broadcast %23 : vector<1x128xf32> to vector<16x128xf32>
    %25 = arith.subf %22, %24 : vector<16x128xf32>
    %c0_14 = arith.constant 0 : index
    %c0_15 = arith.constant 0 : index
    %26 = vector.load %arg9[%c0_14, %c0_15] : memref<1x128xf32, #tpu.memory_space<vmem>>, vector<1x128xf32>
    %cst_16 = arith.constant 9.99999974E-6 : f32
    %27 = vector.broadcast %cst_16 : f32 to vector<1x128xf32>
    %28 = arith.addf %26, %27 : vector<1x128xf32>
    %29 = math.rsqrt %28 : vector<1x128xf32>
    %30 = vector.broadcast %29 : vector<1x128xf32> to vector<16x128xf32>
    %31 = arith.mulf %25, %30 : vector<16x128xf32>
    %c0_17 = arith.constant 0 : index
    %c0_18 = arith.constant 0 : index
    %32 = vector.load %arg6[%c0_17, %c0_18] : memref<1x128xf32, #tpu.memory_space<vmem>>, vector<1x128xf32>
    %33 = vector.broadcast %32 : vector<1x128xf32> to vector<16x128xf32>
    %34 = arith.mulf %31, %33 : vector<16x128xf32>
    %c0_19 = arith.constant 0 : index
    %c0_20 = arith.constant 0 : index
    %35 = vector.load %arg7[%c0_19, %c0_20] : memref<1x128xf32, #tpu.memory_space<vmem>>, vector<1x128xf32>
    %36 = vector.broadcast %35 : vector<1x128xf32> to vector<16x128xf32>
    %37 = arith.addf %34, %36 : vector<16x128xf32>
    %cst_21 = arith.constant 0.000000e+00 : f32
    %38 = vector.broadcast %cst_21 : f32 to vector<16x128xf32>
    %39 = arith.cmpf ogt, %37, %38 : vector<16x128xf32>
    %cst_22 = arith.constant 0.00999999977 : f32
    %40 = vector.broadcast %cst_22 : f32 to vector<16x128xf32>
    %41 = arith.mulf %40, %37 : vector<16x128xf32>
    %42 = arith.select %39, %37, %41 : vector<16x128xi1>, vector<16x128xf32>
    %c0_23 = arith.constant 0 : index
    %c0_24 = arith.constant 0 : index
    %43 = vector.load %arg10[%c0_23, %c0_24] : memref<128x128xf32, #tpu.memory_space<vmem>>, vector<128x128xf32>
    %cst_25 = arith.constant dense<0.000000e+00> : vector<16x128xf32>
    %44 = tpu.matmul %42, %43, %cst_25 {dimension_numbers = #tpu.dot_dimension_numbers<[1], [0], [0], [1], [0, 0, 1, 1], [], []>} : vector<16x128xf32>, vector<128x128xf32>, vector<16x128xf32> -> vector<16x128xf32>
    %c0_26 = arith.constant 0 : index
    %c0_27 = arith.constant 0 : index
    %45 = vector.load %arg11[%c0_26, %c0_27] : memref<1x128xf32, #tpu.memory_space<vmem>>, vector<1x128xf32>
    %46 = vector.broadcast %45 : vector<1x128xf32> to vector<16x128xf32>
    %47 = arith.addf %44, %46 : vector<16x128xf32>
    %c0_28 = arith.constant 0 : index
    %c0_29 = arith.constant 0 : index
    %48 = vector.load %arg12[%c0_28, %c0_29] : memref<128x1xf32, #tpu.memory_space<vmem>>, vector<128x1xf32>
    %49 = arith.mulf %48, %48 : vector<128x1xf32>
    %50 = vector.shape_cast %49 : vector<128x1xf32> to vector<1x128x1xf32>
    %cst_30 = arith.constant dense<0.000000e+00> : vector<1xf32>
    %51 = vector.multi_reduction <add>, %50, %cst_30 [1, 2] : vector<1x128x1xf32> to vector<1xf32>
    %52 = vector.shape_cast %51 : vector<1xf32> to vector<1x1x1xf32>
    %53 = vector.extract %52[0, 0, 0] : f32 from vector<1x1x1xf32>
    %54 = vector.broadcast %53 : f32 to vector<1x1xf32>
    %55 = math.rsqrt %54 : vector<1x1xf32>
    %cst_31 = arith.constant dense<0.000000e+00> : vector<16x1xf32>
    %56 = tpu.matmul %47, %48, %cst_31 {dimension_numbers = #tpu.dot_dimension_numbers<[1], [0], [0], [1], [0, 0, 1, 1], [], []>} : vector<16x128xf32>, vector<128x1xf32>, vector<16x1xf32> -> vector<16x1xf32>
    %57 = vector.broadcast %55 : vector<1x1xf32> to vector<16x1xf32>
    %58 = arith.mulf %56, %57 : vector<16x1xf32>
    %59 = math.tanh %58 : vector<16x1xf32>
    %60 = vector.broadcast %59 : vector<16x1xf32> to vector<16x128xf32>
    %61 = arith.mulf %47, %60 : vector<16x128xf32>
    %c0_32 = arith.constant 0 : index
    %c0_33 = arith.constant 0 : index
    %62 = vector.load %arg13[%c0_32, %c0_33] : memref<16x128xf32, #tpu.memory_space<vmem>>, vector<16x128xf32>
    tpu.vector_store %arg13[%c0_32, %c0_33], %61 {strides = array<i32>} : memref<16x128xf32, #tpu.memory_space<vmem>>, vector<16x128xf32>,
    %c0_34 = arith.constant 0 : index
    %c0_35 = arith.constant 0 : index
    %63 = vector.load %arg14[%c0_34, %c0_35] : memref<16x1xf32, #tpu.memory_space<vmem>>, vector<16x1xf32>
    tpu.vector_store %arg14[%c0_34, %c0_35], %59 {strides = array<i32>} : memref<16x1xf32, #tpu.memory_space<vmem>>, vector<16x1xf32>,
    return
  }
  func.func @transform_0(%arg0: i32) -> (i32, i32) {
    %c0_i32 = arith.constant 0 : i32
    %c0_i32_0 = arith.constant 0 : i32
    return %arg0, %c0_i32 : i32, i32
  }
  func.func @transform_1(%arg0: i32) -> (i32, i32) {
    %c0_i32 = arith.constant 0 : i32
    %c0_i32_0 = arith.constant 0 : i32
    %c0_i32_1 = arith.constant 0 : i32
    return %c0_i32, %c0_i32_0 : i32, i32
  }
  func.func @transform_2(%arg0: i32) -> (i32, i32) {
    %c0_i32 = arith.constant 0 : i32
    %c0_i32_0 = arith.constant 0 : i32
    %c0_i32_1 = arith.constant 0 : i32
    return %c0_i32, %c0_i32_0 : i32, i32
  }
  func.func @transform_3(%arg0: i32) -> (i32, i32) {
    %c0_i32 = arith.constant 0 : i32
    %c0_i32_0 = arith.constant 0 : i32
    %c0_i32_1 = arith.constant 0 : i32
    return %c0_i32, %c0_i32_0 : i32, i32
  }
  func.func @transform_4(%arg0: i32) -> (i32, i32) {
    %c0_i32 = arith.constant 0 : i32
    %c0_i32_0 = arith.constant 0 : i32
    %c0_i32_1 = arith.constant 0 : i32
    return %c0_i32, %c0_i32_0 : i32, i32
  }
  func.func @transform_5(%arg0: i32) -> (i32, i32) {
    %c0_i32 = arith.constant 0 : i32
    %c0_i32_0 = arith.constant 0 : i32
    %c0_i32_1 = arith.constant 0 : i32
    return %c0_i32, %c0_i32_0 : i32, i32
  }
  func.func @transform_6(%arg0: i32) -> (i32, i32) {
    %c0_i32 = arith.constant 0 : i32
    %c0_i32_0 = arith.constant 0 : i32
    %c0_i32_1 = arith.constant 0 : i32
    return %c0_i32, %c0_i32_0 : i32, i32
  }
  func.func @transform_7(%arg0: i32) -> (i32, i32) {
    %c0_i32 = arith.constant 0 : i32
    %c0_i32_0 = arith.constant 0 : i32
    %c0_i32_1 = arith.constant 0 : i32
    return %c0_i32, %c0_i32_0 : i32, i32
  }
  func.func @transform_8(%arg0: i32) -> (i32, i32) {
    %c0_i32 = arith.constant 0 : i32
    %c0_i32_0 = arith.constant 0 : i32
    %c0_i32_1 = arith.constant 0 : i32
    return %c0_i32, %c0_i32_0 : i32, i32
  }
  func.func @transform_9(%arg0: i32) -> (i32, i32) {
    %c0_i32 = arith.constant 0 : i32
    %c0_i32_0 = arith.constant 0 : i32
    %c0_i32_1 = arith.constant 0 : i32
    return %c0_i32, %c0_i32_0 : i32, i32
  }
  func.func @transform_10(%arg0: i32) -> (i32, i32) {
    %c0_i32 = arith.constant 0 : i32
    %c0_i32_0 = arith.constant 0 : i32
    %c0_i32_1 = arith.constant 0 : i32
    return %c0_i32, %c0_i32_0 : i32, i32
  }
  func.func @transform_11(%arg0: i32) -> (i32, i32) {
    %c0_i32 = arith.constant 0 : i32
    %c0_i32_0 = arith.constant 0 : i32
    %c0_i32_1 = arith.constant 0 : i32
    return %c0_i32, %c0_i32_0 : i32, i32
  }
  func.func @transform_12(%arg0: i32) -> (i32, i32) {
    %c0_i32 = arith.constant 0 : i32
    %c0_i32_0 = arith.constant 0 : i32
    return %arg0, %c0_i32 : i32, i32
  }
  func.func @transform_13(%arg0: i32) -> (i32, i32) {
    %c0_i32 = arith.constant 0 : i32
    %c0_i32_0 = arith.constant 0 : i32
    return %arg0, %c0_i32 : i32, i32
  }
}

module attributes {stable_mosaic.version = 11 : i64} {
  func.func @_gatv2_score_kernel(%arg0: i32, %arg1: memref<8x16xf32, #tpu.memory_space<vmem>>, %arg2: memref<16x128xf32, #tpu.memory_space<vmem>>, %arg3: memref<128x128xf32, #tpu.memory_space<vmem>>, %arg4: memref<128x128xf32, #tpu.memory_space<vmem>>, %arg5: memref<1x128xf32, #tpu.memory_space<vmem>>, %arg6: memref<1x128xf32, #tpu.memory_space<vmem>>, %arg7: memref<128x1xf32, #tpu.memory_space<vmem>>, %arg8: memref<8x128xf32, #tpu.memory_space<vmem>>, %arg9: memref<8x1xf32, #tpu.memory_space<vmem>>) attributes {dimension_semantics = [#tpu.dimension_semantics<parallel>], iteration_bounds = array<i64: 2>, scalar_prefetch = 0 : i64, scratch_operands = 0 : i64, tpu.core_type = #tpu.core_type<tc>, window_params = [{transform_indices = @transform_0, window_bounds = array<i64: 8, 16>}, {pipeline_mode = #tpu.pipeline_mode<synchronous>, transform_indices = @transform_1, window_bounds = array<i64: 16, 128>}, {pipeline_mode = #tpu.pipeline_mode<synchronous>, transform_indices = @transform_2, window_bounds = array<i64: 128, 128>}, {pipeline_mode = #tpu.pipeline_mode<synchronous>, transform_indices = @transform_3, window_bounds = array<i64: 128, 128>}, {pipeline_mode = #tpu.pipeline_mode<synchronous>, transform_indices = @transform_4, window_bounds = array<i64: 1, 128>}, {pipeline_mode = #tpu.pipeline_mode<synchronous>, transform_indices = @transform_5, window_bounds = array<i64: 1, 128>}, {pipeline_mode = #tpu.pipeline_mode<synchronous>, transform_indices = @transform_6, window_bounds = array<i64: 128, 1>}, {transform_indices = @transform_7, window_bounds = array<i64: 8, 128>}, {transform_indices = @transform_8, window_bounds = array<i64: 8, 1>}]} {
    %c8_i32 = arith.constant 8 : i32
    %0 = arith.muli %arg0, %c8_i32 : i32
    %1 = tpu.assume_multiple %0, 8 : i32
    %c0 = arith.constant 0 : index
    %c0_0 = arith.constant 0 : index
    %2 = vector.load %arg2[%c0, %c0_0] : memref<16x128xf32, #tpu.memory_space<vmem>>, vector<16x128xf32>
    %c0_1 = arith.constant 0 : index
    %c0_2 = arith.constant 0 : index
    %3 = vector.load %arg3[%c0_1, %c0_2] : memref<128x128xf32, #tpu.memory_space<vmem>>, vector<128x128xf32>
    %cst = arith.constant dense<0.000000e+00> : vector<16x128xf32>
    %4 = tpu.matmul %2, %3, %cst {dimension_numbers = #tpu.dot_dimension_numbers<[1], [0], [0], [1], [0, 0, 1, 1], [], []>} : vector<16x128xf32>, vector<128x128xf32>, vector<16x128xf32> -> vector<16x128xf32>
    %5 = arith.index_cast %1 : i32 to index
    %c0_3 = arith.constant 0 : index
    %6 = vector.load %arg2[%5, %c0_3] : memref<16x128xf32, #tpu.memory_space<vmem>>, vector<8x128xf32>
    %c0_4 = arith.constant 0 : index
    %c0_5 = arith.constant 0 : index
    %7 = vector.load %arg4[%c0_4, %c0_5] : memref<128x128xf32, #tpu.memory_space<vmem>>, vector<128x128xf32>
    %cst_6 = arith.constant dense<0.000000e+00> : vector<8x128xf32>
    %8 = tpu.matmul %6, %7, %cst_6 {dimension_numbers = #tpu.dot_dimension_numbers<[1], [0], [0], [1], [0, 0, 1, 1], [], []>} : vector<8x128xf32>, vector<128x128xf32>, vector<8x128xf32> -> vector<8x128xf32>
    %9 = vector.shape_cast %8 : vector<8x128xf32> to vector<8x1x128xf32>
    %10 = vector.shape_cast %4 : vector<16x128xf32> to vector<1x16x128xf32>
    %11 = vector.broadcast %9 : vector<8x1x128xf32> to vector<8x16x128xf32>
    %12 = vector.broadcast %10 : vector<1x16x128xf32> to vector<8x16x128xf32>
    %13 = arith.addf %11, %12 : vector<8x16x128xf32>
    %cst_7 = arith.constant 0.000000e+00 : f32
    %14 = vector.broadcast %cst_7 : f32 to vector<8x16x128xf32>
    %15 = arith.cmpf ogt, %13, %14 : vector<8x16x128xf32>
    %cst_8 = arith.constant 2.000000e-01 : f32
    %16 = vector.broadcast %cst_8 : f32 to vector<8x16x128xf32>
    %17 = arith.mulf %16, %13 : vector<8x16x128xf32>
    %18 = arith.select %15, %13, %17 : vector<8x16x128xi1>, vector<8x16x128xf32>
    %c0_9 = arith.constant 0 : index
    %c0_10 = arith.constant 0 : index
    %19 = vector.load %arg5[%c0_9, %c0_10] : memref<1x128xf32, #tpu.memory_space<vmem>>, vector<1x128xf32>
    %20 = vector.shape_cast %19 : vector<1x128xf32> to vector<1x1x128xf32>
    %21 = vector.broadcast %20 : vector<1x1x128xf32> to vector<8x16x128xf32>
    %22 = arith.mulf %18, %21 : vector<8x16x128xf32>
    %cst_11 = arith.constant dense<0.000000e+00> : vector<8x16xf32>
    %23 = vector.multi_reduction <add>, %22, %cst_11 [2] : vector<8x16x128xf32> to vector<8x16xf32>
    %24 = tpu.iota {dimensions = array<i32: 0>} : vector<8x16xi32>
    %25 = vector.broadcast %1 : i32 to vector<8x16xi32>
    %26 = arith.addi %24, %25 : vector<8x16xi32>
    %27 = tpu.iota {dimensions = array<i32: 1>} : vector<8x16xi32>
    %c0_12 = arith.constant 0 : index
    %c0_13 = arith.constant 0 : index
    %28 = vector.load %arg1[%c0_12, %c0_13] : memref<8x16xf32, #tpu.memory_space<vmem>>, vector<8x16xf32>
    %29 = arith.cmpi eq, %26, %27 : vector<8x16xi32>
    %30 = arith.extui %29 : vector<8x16xi1> to vector<8x16xi32>
    %31 = arith.sitofp %30 : vector<8x16xi32> to vector<8x16xf32>
    %32 = arith.maximumf %28, %31 : vector<8x16xf32>
    %cst_14 = arith.constant 0.000000e+00 : f32
    %33 = vector.broadcast %cst_14 : f32 to vector<8x16xf32>
    %34 = arith.cmpf ogt, %32, %33 : vector<8x16xf32>
    %cst_15 = arith.constant -1.000000e+30 : f32
    %35 = vector.broadcast %cst_15 : f32 to vector<8x16xf32>
    %36 = arith.select %34, %23, %35 : vector<8x16xi1>, vector<8x16xf32>
    %cst_16 = arith.constant dense<0xFF800000> : vector<8xf32>
    %37 = vector.multi_reduction <maximumf>, %36, %cst_16 [1] : vector<8x16xf32> to vector<8xf32>
    %38 = vector.shape_cast %37 : vector<8xf32> to vector<8x1xf32>
    %39 = vector.broadcast %38 : vector<8x1xf32> to vector<8x16xf32>
    %40 = arith.subf %36, %39 : vector<8x16xf32>
    %41 = math.exp %40 : vector<8x16xf32>
    %42 = arith.mulf %41, %32 : vector<8x16xf32>
    %cst_17 = arith.constant dense<0.000000e+00> : vector<8xf32>
    %43 = vector.multi_reduction <add>, %42, %cst_17 [1] : vector<8x16xf32> to vector<8xf32>
    %44 = vector.shape_cast %43 : vector<8xf32> to vector<8x1xf32>
    %45 = tpu.reciprocal %44 {approx = true} : vector<8x1xf32> -> vector<8x1xf32>
    %46 = vector.broadcast %45 : vector<8x1xf32> to vector<8x16xf32>
    %47 = arith.mulf %42, %46 : vector<8x16xf32>
    %cst_18 = arith.constant dense<0.000000e+00> : vector<8x128xf32>
    %48 = tpu.matmul %47, %4, %cst_18 {dimension_numbers = #tpu.dot_dimension_numbers<[1], [0], [0], [1], [0, 0, 1, 1], [], []>} : vector<8x16xf32>, vector<16x128xf32>, vector<8x128xf32> -> vector<8x128xf32>
    %c0_19 = arith.constant 0 : index
    %c0_20 = arith.constant 0 : index
    %49 = vector.load %arg6[%c0_19, %c0_20] : memref<1x128xf32, #tpu.memory_space<vmem>>, vector<1x128xf32>
    %50 = vector.broadcast %49 : vector<1x128xf32> to vector<8x128xf32>
    %51 = arith.addf %48, %50 : vector<8x128xf32>
    %cst_21 = arith.constant 0.000000e+00 : f32
    %52 = vector.broadcast %cst_21 : f32 to vector<8x128xf32>
    %53 = arith.cmpf ogt, %51, %52 : vector<8x128xf32>
    %cst_22 = arith.constant 0.00999999977 : f32
    %54 = vector.broadcast %cst_22 : f32 to vector<8x128xf32>
    %55 = arith.mulf %54, %51 : vector<8x128xf32>
    %56 = arith.select %53, %51, %55 : vector<8x128xi1>, vector<8x128xf32>
    %c0_23 = arith.constant 0 : index
    %c0_24 = arith.constant 0 : index
    %57 = vector.load %arg7[%c0_23, %c0_24] : memref<128x1xf32, #tpu.memory_space<vmem>>, vector<128x1xf32>
    %58 = arith.mulf %57, %57 : vector<128x1xf32>
    %59 = vector.shape_cast %58 : vector<128x1xf32> to vector<1x128x1xf32>
    %cst_25 = arith.constant dense<0.000000e+00> : vector<1xf32>
    %60 = vector.multi_reduction <add>, %59, %cst_25 [1, 2] : vector<1x128x1xf32> to vector<1xf32>
    %61 = vector.shape_cast %60 : vector<1xf32> to vector<1x1x1xf32>
    %62 = vector.extract %61[0, 0, 0] : f32 from vector<1x1x1xf32>
    %63 = vector.broadcast %62 : f32 to vector<1x1xf32>
    %64 = math.rsqrt %63 : vector<1x1xf32>
    %cst_26 = arith.constant dense<0.000000e+00> : vector<8x1xf32>
    %65 = tpu.matmul %56, %57, %cst_26 {dimension_numbers = #tpu.dot_dimension_numbers<[1], [0], [0], [1], [0, 0, 1, 1], [], []>} : vector<8x128xf32>, vector<128x1xf32>, vector<8x1xf32> -> vector<8x1xf32>
    %66 = vector.broadcast %64 : vector<1x1xf32> to vector<8x1xf32>
    %67 = arith.mulf %65, %66 : vector<8x1xf32>
    %68 = math.tanh %67 : vector<8x1xf32>
    %69 = vector.broadcast %68 : vector<8x1xf32> to vector<8x128xf32>
    %70 = arith.mulf %56, %69 : vector<8x128xf32>
    %c0_27 = arith.constant 0 : index
    %c0_28 = arith.constant 0 : index
    %71 = vector.load %arg8[%c0_27, %c0_28] : memref<8x128xf32, #tpu.memory_space<vmem>>, vector<8x128xf32>
    tpu.vector_store %arg8[%c0_27, %c0_28], %70 {strides = array<i32>} : memref<8x128xf32, #tpu.memory_space<vmem>>, vector<8x128xf32>,
    %c0_29 = arith.constant 0 : index
    %c0_30 = arith.constant 0 : index
    %72 = vector.load %arg9[%c0_29, %c0_30] : memref<8x1xf32, #tpu.memory_space<vmem>>, vector<8x1xf32>
    tpu.vector_store %arg9[%c0_29, %c0_30], %68 {strides = array<i32>} : memref<8x1xf32, #tpu.memory_space<vmem>>, vector<8x1xf32>,
    return
  }
  func.func @transform_0(%arg0: i32) -> (i32, i32) {
    %c0_i32 = arith.constant 0 : i32
    %c0_i32_0 = arith.constant 0 : i32
    return %arg0, %c0_i32 : i32, i32
  }
  func.func @transform_1(%arg0: i32) -> (i32, i32) {
    %c0_i32 = arith.constant 0 : i32
    %c0_i32_0 = arith.constant 0 : i32
    %c0_i32_1 = arith.constant 0 : i32
    return %c0_i32, %c0_i32_0 : i32, i32
  }
  func.func @transform_2(%arg0: i32) -> (i32, i32) {
    %c0_i32 = arith.constant 0 : i32
    %c0_i32_0 = arith.constant 0 : i32
    %c0_i32_1 = arith.constant 0 : i32
    return %c0_i32, %c0_i32_0 : i32, i32
  }
  func.func @transform_3(%arg0: i32) -> (i32, i32) {
    %c0_i32 = arith.constant 0 : i32
    %c0_i32_0 = arith.constant 0 : i32
    %c0_i32_1 = arith.constant 0 : i32
    return %c0_i32, %c0_i32_0 : i32, i32
  }
  func.func @transform_4(%arg0: i32) -> (i32, i32) {
    %c0_i32 = arith.constant 0 : i32
    %c0_i32_0 = arith.constant 0 : i32
    %c0_i32_1 = arith.constant 0 : i32
    return %c0_i32, %c0_i32_0 : i32, i32
  }
  func.func @transform_5(%arg0: i32) -> (i32, i32) {
    %c0_i32 = arith.constant 0 : i32
    %c0_i32_0 = arith.constant 0 : i32
    %c0_i32_1 = arith.constant 0 : i32
    return %c0_i32, %c0_i32_0 : i32, i32
  }
  func.func @transform_6(%arg0: i32) -> (i32, i32) {
    %c0_i32 = arith.constant 0 : i32
    %c0_i32_0 = arith.constant 0 : i32
    %c0_i32_1 = arith.constant 0 : i32
    return %c0_i32, %c0_i32_0 : i32, i32
  }
  func.func @transform_7(%arg0: i32) -> (i32, i32) {
    %c0_i32 = arith.constant 0 : i32
    %c0_i32_0 = arith.constant 0 : i32
    return %arg0, %c0_i32 : i32, i32
  }
  func.func @transform_8(%arg0: i32) -> (i32, i32) {
    %c0_i32 = arith.constant 0 : i32
    %c0_i32_0 = arith.constant 0 : i32
    return %arg0, %c0_i32 : i32, i32
  }
}

module attributes {stable_mosaic.version = 11 : i64} {
  func.func @_lin_pool_lin_kernel(%arg0: memref<2x4x128xf32, #tpu.memory_space<vmem>>, %arg1: memref<128x128xf32, #tpu.memory_space<vmem>>, %arg2: memref<1x128xf32, #tpu.memory_space<vmem>>, %arg3: memref<128x128xf32, #tpu.memory_space<vmem>>, %arg4: memref<1x128xf32, #tpu.memory_space<vmem>>, %arg5: memref<2x128xf32, #tpu.memory_space<vmem>>) attributes {dimension_semantics = [], scalar_prefetch = 0 : i64, scratch_operands = 0 : i64, tpu.core_type = #tpu.core_type<tc>} {
    %c0 = arith.constant 0 : index
    %c0_0 = arith.constant 0 : index
    %c0_1 = arith.constant 0 : index
    %0 = vector.load %arg0[%c0, %c0_0, %c0_1] : memref<2x4x128xf32, #tpu.memory_space<vmem>>, vector<2x4x128xf32>
    %cst = arith.constant dense<0.000000e+00> : vector<2x128xf32>
    %1 = vector.multi_reduction <add>, %0, %cst [1] : vector<2x4x128xf32> to vector<2x128xf32>
    %c0_2 = arith.constant 0 : index
    %c0_3 = arith.constant 0 : index
    %2 = vector.load %arg1[%c0_2, %c0_3] : memref<128x128xf32, #tpu.memory_space<vmem>>, vector<128x128xf32>
    %cst_4 = arith.constant dense<0.000000e+00> : vector<2x128xf32>
    %3 = tpu.matmul %1, %2, %cst_4 {dimension_numbers = #tpu.dot_dimension_numbers<[1], [0], [0], [1], [0, 0, 1, 1], [], []>} : vector<2x128xf32>, vector<128x128xf32>, vector<2x128xf32> -> vector<2x128xf32>
    %c0_5 = arith.constant 0 : index
    %c0_6 = arith.constant 0 : index
    %4 = vector.load %arg2[%c0_5, %c0_6] : memref<1x128xf32, #tpu.memory_space<vmem>>, vector<1x128xf32>
    %cst_7 = arith.constant 4.000000e+00 : f32
    %5 = vector.broadcast %cst_7 : f32 to vector<1x128xf32>
    %6 = arith.mulf %5, %4 : vector<1x128xf32>
    %7 = vector.broadcast %6 : vector<1x128xf32> to vector<2x128xf32>
    %8 = arith.addf %3, %7 : vector<2x128xf32>
    %c0_8 = arith.constant 0 : index
    %c0_9 = arith.constant 0 : index
    %9 = vector.load %arg3[%c0_8, %c0_9] : memref<128x128xf32, #tpu.memory_space<vmem>>, vector<128x128xf32>
    %cst_10 = arith.constant dense<0.000000e+00> : vector<2x128xf32>
    %10 = tpu.matmul %8, %9, %cst_10 {dimension_numbers = #tpu.dot_dimension_numbers<[1], [0], [0], [1], [0, 0, 1, 1], [], []>} : vector<2x128xf32>, vector<128x128xf32>, vector<2x128xf32> -> vector<2x128xf32>
    %c0_11 = arith.constant 0 : index
    %c0_12 = arith.constant 0 : index
    %11 = vector.load %arg4[%c0_11, %c0_12] : memref<1x128xf32, #tpu.memory_space<vmem>>, vector<1x128xf32>
    %12 = vector.broadcast %11 : vector<1x128xf32> to vector<2x128xf32>
    %13 = arith.addf %10, %12 : vector<2x128xf32>
    %c0_13 = arith.constant 0 : index
    %c0_14 = arith.constant 0 : index
    %14 = vector.load %arg5[%c0_13, %c0_14] : memref<2x128xf32, #tpu.memory_space<vmem>>, vector<2x128xf32>
    tpu.vector_store %arg5[%c0_13, %c0_14], %13 {strides = array<i32>} : memref<2x128xf32, #tpu.memory_space<vmem>>, vector<2x128xf32>,
    return
  }
}

</mosaic_0001>

<llo_original>
// kernel: agnn_efg_forward.3
$region0: #{agnn_efg_forward.3}
  #allocation0 [shape = 'u32[]', space=smem, size = 0x4, offset = 0x4, fixed_abs, tag = 'smem constant byte address 0x4 - core index']
  #allocation1 [shape = 'u32[144,128]{1,0:T(1,128)}', space=vmem, size = 0x12000, scoped, tag = 'internal scratch']
  %s0 = inlined_call_operand.vmem [shape: bf16[32,32], index: 0, kind: input, shape index: {}]
  %s1 = inlined_call_operand.vmem [shape: f32[32,128], index: 1, kind: input, shape index: {}]
  %s2 = inlined_call_operand.vmem [shape: f32[32,1], index: 2, kind: input, shape index: {}]
  %s3 = inlined_call_operand.vmem [shape: f32[128,128], index: 3, kind: input, shape index: {}]
  %s4 = inlined_call_operand.vmem [shape: f32[1,128], index: 4, kind: input, shape index: {}]
  %s5 = inlined_call_operand.vmem [shape: f32[1,128], index: 5, kind: input, shape index: {}]
  %s6 = inlined_call_operand.vmem [shape: f32[1,128], index: 6, kind: input, shape index: {}]
  %s7 = inlined_call_operand.vmem [shape: f32[1,128], index: 7, kind: input, shape index: {}]
  %s8 = inlined_call_operand.vmem [shape: f32[1,128], index: 8, kind: input, shape index: {}]
  %s9 = inlined_call_operand.vmem [shape: f32[128,128], index: 9, kind: input, shape index: {}]
  %s10 = inlined_call_operand.vmem [shape: f32[1,128], index: 10, kind: input, shape index: {}]
  %s11 = inlined_call_operand.vmem [shape: f32[128,1], index: 11, kind: input, shape index: {}]
  %s12 = inlined_call_operand.vmem [shape: f32[32,128], index: 12, kind: output, shape index: {0}]
  %s13 = inlined_call_operand.vmem [shape: f32[32,1], index: 13, kind: output, shape index: {1}]
  %14 = xla_tuple %s12, %s13
  %s15 = sld [smem:[#allocation0]]
  $region89: #{agnn_efg_forward.3} parent=0
    _
  %s17 = ssub.s32 1, %s15
  %s18 = scalar_select 0, %s17, %s15
  loop: start=0, step=1, limit=4
  $region2: #{agnn_efg_forward.3} parent=0 // loop_pre_header
    _
  $region3: #{agnn_efg_forward.3} parent=0 // loop_header
    %s20 = sphi 0, %s24
    %p21 = scmp.ge.s32.totalorder %s20, 4
    %s30 = sphi 0, %s32
    %s33 = sphi 0, %s30
    %s34 = sphi 0, %s33
    %s50 = sphi 0, %s34
    %s54 = sphi 0, %s54
    %s56 = sphi 0, %s54
    %s57 = sphi 0, %s56
    %s71 = sphi 0, %s57
    %s75 = sphi 0, %s75
    %s77 = sphi 0, %s75
    %s78 = sphi 0, %s77
    %s92 = sphi 0, %s78
    %s96 = sphi 0, %s96
    %s98 = sphi 0, %s96
    %s99 = sphi 0, %s98
    %s113 = sphi 0, %s99
    %s117 = sphi 0, %s117
    %s119 = sphi 0, %s117
    %s120 = sphi 0, %s119
    %s134 = sphi 0, %s120
    %s138 = sphi 0, %s138
    %s140 = sphi 0, %s138
    %s141 = sphi 0, %s140
    %s155 = sphi 0, %s141
    %s159 = sphi 0, %s159
    %s161 = sphi 0, %s159
    %s162 = sphi 0, %s161
    %s176 = sphi 0, %s162
    %s180 = sphi 0, %s180
    %s182 = sphi 0, %s180
    %s183 = sphi 0, %s182
    %s197 = sphi 0, %s183
    %s201 = sphi 0, %s201
    %s203 = sphi 0, %s201
    %s204 = sphi 0, %s203
    %s218 = sphi 0, %s204
    %s222 = sphi 0, %s222
    %s224 = sphi 0, %s222
    %s225 = sphi 0, %s224
    %s239 = sphi 0, %s225
    %s243 = sphi 0, %s243
    %s245 = sphi 0, %s243
    %s246 = sphi 0, %s245
    %s260 = sphi 0, %s246
    %s264 = sphi 0, %s264
    %s266 = sphi 0, %s264
    %s267 = sphi 0, %s266
    %s281 = sphi 0, %s267
    %s287 = sphi 0, %s289
    %s290 = sphi 0, %s287
    %s291 = sphi 0, %s290
    %s307 = sphi 0, %s291
    %s313 = sphi 0, %s315
    %s316 = sphi 0, %s313
    %s317 = sphi 0, %s316
    %s333 = sphi 0, %s317
  $region4: #{agnn_efg_forward.3} parent=0 // loop_header_branch
    %23 = sbr.rel (%p21) target = $region8
  $region5: #{agnn_efg_forward.3} parent=0 // loop_body
    %s25 = ssub.s32 %s20, 1
    %s26 = ssub.s32 %s20, 2
    %s27 = sadd.s32 %s20, 1
    %s28 = ssub.s32 %s20, %s27
    %p29 = scmp.eq.s32.totalorder %s28, 0
    %s31 = sadd.s32 %s30, 1
    %s32 = scalar_select %p29, %s30, %s31
    %p35 = pneg %p29
    %p36 = scmp.eq.s32.totalorder %s20, 1
    %p37 = por %p35, %p36
    %p38 = scmp.ne.s32.totalorder %s30, %s33
    %p39 = scmp.eq.s32.totalorder %s20, 0
    %p40 = por %p38, %p39
    %p41 = scmp.ne.s32.totalorder %s30, %s33
    %p42 = scmp.eq.s32.totalorder %s25, 1
    %p43 = por %p41, %p42
    %p44 = scmp.ne.s32.totalorder %s33, %s34
    %p45 = scmp.eq.s32.totalorder %s25, 0
    %p46 = por %p44, %p45
    %p47 = scmp.ne.s32.totalorder %s33, %s34
    %p48 = scmp.eq.s32.totalorder %s26, 1
    %p49 = por %p47, %p48
    %p51 = scmp.ne.s32.totalorder %s34, %s50
    %p52 = scmp.eq.s32.totalorder %s26, 0
    %p53 = por %p51, %p52
    %s55 = sadd.s32 %s54, 1
    %p58 = scmp.eq.s32.totalorder %s20, 1
    %p59 = scmp.ne.s32.totalorder %s54, %s56
    %p60 = scmp.eq.s32.totalorder %s20, 0
    %p61 = por %p59, %p60
    %p62 = scmp.ne.s32.totalorder %s54, %s56
    %p63 = scmp.eq.s32.totalorder %s25, 1
    %p64 = por %p62, %p63
    %p65 = scmp.ne.s32.totalorder %s56, %s57
    %p66 = scmp.eq.s32.totalorder %s25, 0
    %p67 = por %p65, %p66
    %p68 = scmp.ne.s32.totalorder %s56, %s57
    %p69 = scmp.eq.s32.totalorder %s26, 1
    %p70 = por %p68, %p69
    %p72 = scmp.ne.s32.totalorder %s57, %s71
    %p73 = scmp.eq.s32.totalorder %s26, 0
    %p74 = por %p72, %p73
    %s76 = sadd.s32 %s75, 1
    %p79 = scmp.eq.s32.totalorder %s20, 1
    %p80 = scmp.ne.s32.totalorder %s75, %s77
    %p81 = scmp.eq.s32.totalorder %s20, 0
    %p82 = por %p80, %p81
    %p83 = scmp.ne.s32.totalorder %s75, %s77
    %p84 = scmp.eq.s32.totalorder %s25, 1
    %p85 = por %p83, %p84
    %p86 = scmp.ne.s32.totalorder %s77, %s78
    %p87 = scmp.eq.s32.totalorder %s25, 0
    %p88 = por %p86, %p87
    %p89 = scmp.ne.s32.totalorder %s77, %s78
    %p90 = scmp.eq.s32.totalorder %s26, 1
    %p91 = por %p89, %p90
    %p93 = scmp.ne.s32.totalorder %s78, %s92
    %p94 = scmp.eq.s32.totalorder %s26, 0
    %p95 = por %p93, %p94
    %s97 = sadd.s32 %s96, 1
    %p100 = scmp.eq.s32.totalorder %s20, 1
    %p101 = scmp.ne.s32.totalorder %s96, %s98
    %p102 = scmp.eq.s32.totalorder %s20, 0
    %p103 = por %p101, %p102
    %p104 = scmp.ne.s32.totalorder %s96, %s98
    %p105 = scmp.eq.s32.totalorder %s25, 1
    %p106 = por %p104, %p105
    %p107 = scmp.ne.s32.totalorder %s98, %s99
    %p108 = scmp.eq.s32.totalorder %s25, 0
    %p109 = por %p107, %p108
    %p110 = scmp.ne.s32.totalorder %s98, %s99
    %p111 = scmp.eq.s32.totalorder %s26, 1
    %p112 = por %p110, %p111
    %p114 = scmp.ne.s32.totalorder %s99, %s113
    %p115 = scmp.eq.s32.totalorder %s26, 0
    %p116 = por %p114, %p115
    %s118 = sadd.s32 %s117, 1
    %p121 = scmp.eq.s32.totalorder %s20, 1
    %p122 = scmp.ne.s32.totalorder %s117, %s119
    %p123 = scmp.eq.s32.totalorder %s20, 0
    %p124 = por %p122, %p123
    %p125 = scmp.ne.s32.totalorder %s117, %s119
    %p126 = scmp.eq.s32.totalorder %s25, 1
    %p127 = por %p125, %p126
    %p128 = scmp.ne.s32.totalorder %s119, %s120
    %p129 = scmp.eq.s32.totalorder %s25, 0
    %p130 = por %p128, %p129
    %p131 = scmp.ne.s32.totalorder %s119, %s120
    %p132 = scmp.eq.s32.totalorder %s26, 1
    %p133 = por %p131, %p132
    %p135 = scmp.ne.s32.totalorder %s120, %s134
    %p136 = scmp.eq.s32.totalorder %s26, 0
    %p137 = por %p135, %p136
    %s139 = sadd.s32 %s138, 1
    %p142 = scmp.eq.s32.totalorder %s20, 1
    %p143 = scmp.ne.s32.totalorder %s138, %s140
    %p144 = scmp.eq.s32.totalorder %s20, 0
    %p145 = por %p143, %p144
    %p146 = scmp.ne.s32.totalorder %s138, %s140
    %p147 = scmp.eq.s32.totalorder %s25, 1
    %p148 = por %p146, %p147
    %p149 = scmp.ne.s32.totalorder %s140, %s141
    %p150 = scmp.eq.s32.totalorder %s25, 0
    %p151 = por %p149, %p150
    %p152 = scmp.ne.s32.totalorder %s140, %s141
    %p153 = scmp.eq.s32.totalorder %s26, 1
    %p154 = por %p152, %p153
    %p156 = scmp.ne.s32.totalorder %s141, %s155
    %p157 = scmp.eq.s32.totalorder %s26, 0
    %p158 = por %p156, %p157
    %s160 = sadd.s32 %s159, 1
    %p163 = scmp.eq.s32.totalorder %s20, 1
    %p164 = scmp.ne.s32.totalorder %s159, %s161
    %p165 = scmp.eq.s32.totalorder %s20, 0
    %p166 = por %p164, %p165
    %p167 = scmp.ne.s32.totalorder %s159, %s161
    %p168 = scmp.eq.s32.totalorder %s25, 1
    %p169 = por %p167, %p168
    %p170 = scmp.ne.s32.totalorder %s161, %s162
    %p171 = scmp.eq.s32.totalorder %s25, 0
    %p172 = por %p170, %p171
    %p173 = scmp.ne.s32.totalorder %s161, %s162
    %p174 = scmp.eq.s32.totalorder %s26, 1
    %p175 = por %p173, %p174
    %p177 = scmp.ne.s32.totalorder %s162, %s176
    %p178 = scmp.eq.s32.totalorder %s26, 0
    %p179 = por %p177, %p178
    %s181 = sadd.s32 %s180, 1
    %p184 = scmp.eq.s32.totalorder %s20, 1
    %p185 = scmp.ne.s32.totalorder %s180, %s182
    %p186 = scmp.eq.s32.totalorder %s20, 0
    %p187 = por %p185, %p186
    %p188 = scmp.ne.s32.totalorder %s180, %s182
    %p189 = scmp.eq.s32.totalorder %s25, 1
    %p190 = por %p188, %p189
    %p191 = scmp.ne.s32.totalorder %s182, %s183
    %p192 = scmp.eq.s32.totalorder %s25, 0
    %p193 = por %p191, %p192
    %p194 = scmp.ne.s32.totalorder %s182, %s183
    %p195 = scmp.eq.s32.totalorder %s26, 1
    %p196 = por %p194, %p195
    %p198 = scmp.ne.s32.totalorder %s183, %s197
    %p199 = scmp.eq.s32.totalorder %s26, 0
    %p200 = por %p198, %p199
    %s202 = sadd.s32 %s201, 1
    %p205 = scmp.eq.s32.totalorder %s20, 1
    %p206 = scmp.ne.s32.totalorder %s201, %s203
    %p207 = scmp.eq.s32.totalorder %s20, 0
    %p208 = por %p206, %p207
    %p209 = scmp.ne.s32.totalorder %s201, %s203
    %p210 = scmp.eq.s32.totalorder %s25, 1
    %p211 = por %p209, %p210
    %p212 = scmp.ne.s32.totalorder %s203, %s204
    %p213 = scmp.eq.s32.totalorder %s25, 0
    %p214 = por %p212, %p213
    %p215 = scmp.ne.s32.totalorder %s203, %s204
    %p216 = scmp.eq.s32.totalorder %s26, 1
    %p217 = por %p215, %p216
    %p219 = scmp.ne.s32.totalorder %s204, %s218
    %p220 = scmp.eq.s32.totalorder %s26, 0
    %p221 = por %p219, %p220
    %s223 = sadd.s32 %s222, 1
    %p226 = scmp.eq.s32.totalorder %s20, 1
    %p227 = scmp.ne.s32.totalorder %s222, %s224
    %p228 = scmp.eq.s32.totalorder %s20, 0
    %p229 = por %p227, %p228
    %p230 = scmp.ne.s32.totalorder %s222, %s224
    %p231 = scmp.eq.s32.totalorder %s25, 1
    %p232 = por %p230, %p231
    %p233 = scmp.ne.s32.totalorder %s224, %s225
    %p234 = scmp.eq.s32.totalorder %s25, 0
    %p235 = por %p233, %p234
    %p236 = scmp.ne.s32.totalorder %s224, %s225
    %p237 = scmp.eq.s32.totalorder %s26, 1
    %p238 = por %p236, %p237
    %p240 = scmp.ne.s32.totalorder %s225, %s239
    %p241 = scmp.eq.s32.totalorder %s26, 0
    %p242 = por %p240, %p241
    %s244 = sadd.s32 %s243, 1
    %p247 = scmp.eq.s32.totalorder %s20, 1
    %p248 = scmp.ne.s32.totalorder %s243, %s245
    %p249 = scmp.eq.s32.totalorder %s20, 0
    %p250 = por %p248, %p249
    %p251 = scmp.ne.s32.totalorder %s243, %s245
    %p252 = scmp.eq.s32.totalorder %s25, 1
    %p253 = por %p251, %p252
    %p254 = scmp.ne.s32.totalorder %s245, %s246
    %p255 = scmp.eq.s32.totalorder %s25, 0
    %p256 = por %p254, %p255
    %p257 = scmp.ne.s32.totalorder %s245, %s246
    %p258 = scmp.eq.s32.totalorder %s26, 1
    %p259 = por %p257, %p258
    %p261 = scmp.ne.s32.totalorder %s246, %s260
    %p262 = scmp.eq.s32.totalorder %s26, 0
    %p263 = por %p261, %p262
    %s265 = sadd.s32 %s264, 1
    %p268 = scmp.eq.s32.totalorder %s20, 1
    %p269 = scmp.ne.s32.totalorder %s264, %s266
    %p270 = scmp.eq.s32.totalorder %s20, 0
    %p271 = por %p269, %p270
    %p272 = scmp.ne.s32.totalorder %s264, %s266
    %p273 = scmp.eq.s32.totalorder %s25, 1
    %p274 = por %p272, %p273
    %p275 = scmp.ne.s32.totalorder %s266, %s267
    %p276 = scmp.eq.s32.totalorder %s25, 0
    %p277 = por %p275, %p276
    %p278 = scmp.ne.s32.totalorder %s266, %s267
    %p279 = scmp.eq.s32.totalorder %s26, 1
    %p280 = por %p278, %p279
    %p282 = scmp.ne.s32.totalorder %s267, %s281
    %p283 = scmp.eq.s32.totalorder %s26, 0
    %p284 = por %p282, %p283
    %s285 = ssub.s32 %s20, %s27
    %p286 = scmp.eq.s32.totalorder %s285, 0
    %s288 = sadd.s32 %s287, 1
    %s289 = scalar_select %p286, %s287, %s288
    %p292 = pneg %p286
    %p293 = scmp.eq.s32.totalorder %s20, 1
    %p294 = por %p292, %p293
    %p295 = scmp.ne.s32.totalorder %s287, %s290
    %p296 = scmp.eq.s32.totalorder %s20, 0
    %p297 = por %p295, %p296
    %p298 = scmp.ne.s32.totalorder %s287, %s290
    %p299 = scmp.eq.s32.totalorder %s25, 1
    %p300 = por %p298, %p299
    %p301 = scmp.ne.s32.totalorder %s290, %s291
    %p302 = scmp.eq.s32.totalorder %s25, 0
    %p303 = por %p301, %p302
    %p304 = scmp.ne.s32.totalorder %s290, %s291
    %p305 = scmp.eq.s32.totalorder %s26, 1
    %p306 = por %p304, %p305
    %p308 = scmp.ne.s32.totalorder %s291, %s307
    %p309 = scmp.eq.s32.totalorder %s26, 0
    %p310 = por %p308, %p309
    %s311 = ssub.s32 %s20, %s27
    %p312 = scmp.eq.s32.totalorder %s311, 0
    %s314 = sadd.s32 %s313, 1
    %s315 = scalar_select %p312, %s313, %s314
    %p318 = pneg %p312
    %p319 = scmp.eq.s32.totalorder %s20, 1
    %p320 = por %p318, %p319
    %p321 = scmp.ne.s32.totalorder %s313, %s316
    %p322 = scmp.eq.s32.totalorder %s20, 0
    %p323 = por %p321, %p322
    %p324 = scmp.ne.s32.totalorder %s313, %s316
    %p325 = scmp.eq.s32.totalorder %s25, 1
    %p326 = por %p324, %p325
    %p327 = scmp.ne.s32.totalorder %s316, %s317
    %p328 = scmp.eq.s32.totalorder %s25, 0
    %p329 = por %p327, %p328
    %p330 = scmp.ne.s32.totalorder %s316, %s317
    %p331 = scmp.eq.s32.totalorder %s26, 1
    %p332 = por %p330, %p331
    %p334 = scmp.ne.s32.totalorder %s317, %s333
    %p335 = scmp.eq.s32.totalorder %s26, 0
    %p336 = por %p334, %p335
    %p337 = scmp.le.s32.totalorder 1, %s20
    %p338 = scmp.lt.s32.totalorder %s20, 3
    %p339 = pnand %p337, %p338
    %p340 = pneg %p339
    // Predicated region
    $region9: #{agnn_efg_forward.3} parent=5 // pred_check
      _
    $region10: #{agnn_efg_forward.3} parent=5 // pred_check_branch
      %342 = sbr.rel (%p339) target = $region12
    $region11: #{agnn_efg_forward.3} parent=5 // pred_region
      %s343 = ssub.s32 %s20, 1
      // Predicated region
      $region13: #{agnn_efg_forward.3} parent=11 // pred_check
        %p344 = pneg %p67
      $region14: #{agnn_efg_forward.3} parent=11 // pred_check_branch
        %346 = sbr.rel (%p344) target = $region16
      $region15: #{agnn_efg_forward.3} parent=11 // pred_region
        _
      $region16: #{agnn_efg_forward.3} parent=11 // pred_fallthru
        _
      // Predicated region
      $region17: #{agnn_efg_forward.3} parent=11 // pred_check
        %p347 = pneg %p88
      $region18: #{agnn_efg_forward.3} parent=11 // pred_check_branch
        %349 = sbr.rel (%p347) target = $region20
      $region19: #{agnn_efg_forward.3} parent=11 // pred_region
        _
      $region20: #{agnn_efg_forward.3} parent=11 // pred_fallthru
        _
      // Predicated region
      $region21: #{agnn_efg_forward.3} parent=11 // pred_check
        %p350 = pneg %p109
      $region22: #{agnn_efg_forward.3} parent=11 // pred_check_branch
        %352 = sbr.rel (%p350) target = $region24
      $region23: #{agnn_efg_forward.3} parent=11 // pred_region
        _
      $region24: #{agnn_efg_forward.3} parent=11 // pred_fallthru
        _
      // Predicated region
      $region25: #{agnn_efg_forward.3} parent=11 // pred_check
        %p353 = pneg %p130
      $region26: #{agnn_efg_forward.3} parent=11 // pred_check_branch
        %355 = sbr.rel (%p353) target = $region28
      $region27: #{agnn_efg_forward.3} parent=11 // pred_region
        _
      $region28: #{agnn_efg_forward.3} parent=11 // pred_fallthru
        _
      // Predicated region
      $region29: #{agnn_efg_forward.3} parent=11 // pred_check
        %p356 = pneg %p151
      $region30: #{agnn_efg_forward.3} parent=11 // pred_check_branch
        %358 = sbr.rel (%p356) target = $region32
      $region31: #{agnn_efg_forward.3} parent=11 // pred_region
        _
      $region32: #{agnn_efg_forward.3} parent=11 // pred_fallthru
        _
      // Predicated region
      $region33: #{agnn_efg_forward.3} parent=11 // pred_check
        %p359 = pneg %p172
      $region34: #{agnn_efg_forward.3} parent=11 // pred_check_branch
        %361 = sbr.rel (%p359) target = $region36
      $region35: #{agnn_efg_forward.3} parent=11 // pred_region
        _
      $region36: #{agnn_efg_forward.3} parent=11 // pred_fallthru
        _
      // Predicated region
      $region37: #{agnn_efg_forward.3} parent=11 // pred_check
        %p362 = pneg %p193
      $region38: #{agnn_efg_forward.3} parent=11 // pred_check_branch
        %364 = sbr.rel (%p362) target = $region40
      $region39: #{agnn_efg_forward.3} parent=11 // pred_region
        _
      $region40: #{agnn_efg_forward.3} parent=11 // pred_fallthru
        _
      // Predicated region
      $region41: #{agnn_efg_forward.3} parent=11 // pred_check
        %p365 = pneg %p214
      $region42: #{agnn_efg_forward.3} parent=11 // pred_check_branch
        %367 = sbr.rel (%p365) target = $region44
      $region43: #{agnn_efg_forward.3} parent=11 // pred_region
        _
      $region44: #{agnn_efg_forward.3} parent=11 // pred_fallthru
        _
      // Predicated region
      $region45: #{agnn_efg_forward.3} parent=11 // pred_check
        %p368 = pneg %p235
      $region46: #{agnn_efg_forward.3} parent=11 // pred_check_branch
        %370 = sbr.rel (%p368) target = $region48
      $region47: #{agnn_efg_forward.3} parent=11 // pred_region
        _
      $region48: #{agnn_efg_forward.3} parent=11 // pred_fallthru
        _
      // Predicated region
      $region49: #{agnn_efg_forward.3} parent=11 // pred_check
        %p371 = pneg %p256
      $region50: #{agnn_efg_forward.3} parent=11 // pred_check_branch
        %373 = sbr.rel (%p371) target = $region52
      $region51: #{agnn_efg_forward.3} parent=11 // pred_region
        _
      $region52: #{agnn_efg_forward.3} parent=11 // pred_fallthru
        _
      // Predicated region
      $region53: #{agnn_efg_forward.3} parent=11 // pred_check
        %p374 = pneg %p277
      $region54: #{agnn_efg_forward.3} parent=11 // pred_check_branch
        %376 = sbr.rel (%p374) target = $region56
      $region55: #{agnn_efg_forward.3} parent=11 // pred_region
        _
      $region56: #{agnn_efg_forward.3} parent=11 // pred_fallthru
        _
    $region12: #{agnn_efg_forward.3} parent=5 // pred_fallthru
      _
    %p377 = scmp.lt.s32.totalorder %s20, 2
    // Predicated region
    $region57: #{agnn_efg_forward.3} parent=5 // pred_check
      %p378 = pneg %p377
    $region58: #{agnn_efg_forward.3} parent=5 // pred_check_branch
      %380 = sbr.rel (%p378) target = $region60
    $region59: #{agnn_efg_forward.3} parent=5 // pred_region
      // Predicated region
      $region61: #{agnn_efg_forward.3} parent=59 // pred_check
        %p381 = pneg %p40
      $region62: #{agnn_efg_forward.3} parent=59 // pred_check_branch
        %383 = sbr.rel (%p381) target = $region64
      $region63: #{agnn_efg_forward.3} parent=59 // pred_region
        %s384 = smul.u32 2, %s20
        %p385 = scmp.lt.s32.totalorder %s384, 3
        %s386 = scalar_select %p385, %s384, 3
        %s387 = smul.addr %s386, 4
        %s388 = scalar_lea.vmem %s0, %s387
        %s389 = smul.u32 2, %s20
      $region64: #{agnn_efg_forward.3} parent=59 // pred_fallthru
        _
    $region60: #{agnn_efg_forward.3} parent=5 // pred_fallthru
      _
    %p390 = scmp.le.s32.totalorder 1, %s20
    %p391 = scmp.lt.s32.totalorder %s20, 3
    %p392 = pnand %p390, %p391
    %p393 = pneg %p392
    // Predicated region
    $region65: #{agnn_efg_forward.3} parent=5 // pred_check
      _
    $region66: #{agnn_efg_forward.3} parent=5 // pred_check_branch
      %395 = sbr.rel (%p392) target = $region68
    $region67: #{agnn_efg_forward.3} parent=5 // pred_region
      %s396 = ssub.s32 %s20, 1
      %s397 = smul.u32 2, %s25
      %p398 = scmp.lt.s32.totalorder %s397, 3
      %s399 = scalar_select %p398, %s397, 3
      %s400 = smul.addr %s399, 4
      %s401 = scalar_lea.vmem %s0, %s400
      %p402 = pneg %p46
      %p403 = pneg %p43
      %p404 = pneg %p67
      %p405 = pneg %p64
      %p406 = pneg %p88
      %p407 = pneg %p85
      %p408 = pneg %p109
      %p409 = pneg %p106
      %p410 = pneg %p130
      %p411 = pneg %p127
      %p412 = pneg %p151
      %p413 = pneg %p148
      %p414 = pneg %p172
      %p415 = pneg %p169
      %p416 = pneg %p193
      %p417 = pneg %p190
      %p418 = pneg %p214
      %p419 = pneg %p211
      %p420 = pneg %p235
      %p421 = pneg %p232
      %p422 = pneg %p256
      %p423 = pneg %p253
      %p424 = pneg %p277
      %p425 = pneg %p274
      %p426 = pneg %p303
      %p427 = pneg %p300
      %s428 = smul.u32 2, %s25
      %p429 = scmp.lt.s32.totalorder %s428, 3
      %s430 = scalar_select %p429, %s428, 3
      %s431 = smul.addr %s430, 8
      %s432 = scalar_lea.vmem %s12, %s431
      %p433 = pneg %p329
      %p434 = pneg %p326
      %s435 = smul.u32 2, %s25
      %p436 = scmp.lt.s32.totalorder %s435, 3
      %s437 = scalar_select %p436, %s435, 3
      %s438 = smul.addr %s437, 8
      %s439 = scalar_lea.vmem %s13, %s438
      %s440 = smul.u32 2, %s25
      %p441 = scmp.lt.s32.totalorder %s440, 3
      %s442 = scalar_select %p441, %s440, 3
      %s443 = smul.addr %s442, 4
      %s444 = scalar_lea.vmem %s0, %s443
      %s445 = smul.u32 2, %s25
      %s446 = smul.u32 2, %s25
      %p447 = scmp.lt.s32.totalorder %s446, 3
      %s448 = scalar_select %p447, %s446, 3
      %s449 = smul.addr %s448, 8
      %s450 = scalar_lea.vmem %s12, %s449
      %s451 = smul.u32 2, %s25
      %s452 = smul.u32 2, %s25
      %p453 = scmp.lt.s32.totalorder %s452, 3
      %s454 = scalar_select %p453, %s452, 3
      %s455 = smul.addr %s454, 8
      %s456 = scalar_lea.vmem %s13, %s455
      %s457 = smul.u32 2, %s25
      %s459 = smul.u32 %s25, 16
      %v460 = vld [vmem:[%s2] sm:$0xff]
      %v461 = vld [vmem:[%s2 + $0x8] sm:$0xff]
      %v462 = vld [vmem:[%s2 + $0x10] sm:$0xff]
      %v463 = vld [vmem:[%s2 + $0x18] sm:$0xff]
      %v464 = vld [vmem:[%s1] sm:$0xff]
      %v465 = vld [vmem:[%s1 + $0x8] sm:$0xff]
      %v466 = vld [vmem:[%s1 + $0x10] sm:$0xff]
      %v467 = vld [vmem:[%s1 + $0x18] sm:$0xff]
      %469 = vset.pattern.permute.xlu0 0
      %470 = vperm.xlu0 %469, %v460
      %v471 = vpop.permute.xlu0 %470
      %474 = vset.pattern.permute.xlu0 0
      %475 = vperm.xlu0 %474, %v461
      %v476 = vpop.permute.xlu0 %475
      %479 = vset.pattern.permute.xlu0 0
      %480 = vperm.xlu0 %479, %v462
      %v481 = vpop.permute.xlu0 %480
      %484 = vset.pattern.permute.xlu0 0
      %485 = vperm.xlu0 %484, %v463
      %v486 = vpop.permute.xlu0 %485
      %v488 = vmul.f32 %v471, %v464
      %v489 = vmul.f32 %v476, %v465
      %v490 = vmul.f32 %v481, %v466
      %v491 = vmul.f32 %v486, %v467
      %v492 = vpack.c.bf16 %v489, %v488
      %v493 = vpack.c.bf16 %v491, %v490
      %s494 = scalar_lea.vmem %s1, %s459
      %v495 = vld [vmem:[%s494] sm:$0xff]
      %v496 = vld [vmem:[%s494 + $0x8] sm:$0xff]
      %s497 = scalar_lea.vmem %s2, %s459
      %v498 = vld [vmem:[%s497] sm:$0xff]
      %v499 = vld [vmem:[%s497 + $0x8] sm:$0xff]
      %v500 = vld [vmem:[%s444] sm:$0xf]
      %v501 = vld [vmem:[%s444 + $0x4] sm:$0xf]
      %503 = vset.pattern.permute.xlu0 0
      %504 = vperm.xlu0 %503, %v498
      %v505 = vpop.permute.xlu0 %504
      %508 = vset.pattern.permute.xlu0 0
      %509 = vperm.xlu0 %508, %v499
      %v510 = vpop.permute.xlu0 %509
      %v512 = vmul.f32 %v505, %v495
      %v513 = vmul.f32 %v510, %v496
      %v516 = vunpack.c.l.b16 %v500
      %v517 = vunpack.c.l.b16 %v501
      %v518 = vpack.c.b16 %v517, %v516
      %vm519 = vcmask 261120
      %v521 = vsel %vm519, %v518, 0
      %523 = vmatprep.subr.bf16.mxu0 0
      %524 = vmatpush1.bf16.msra.mxu0 %v492
      %525 = vmatprep.subr.bf16.mxu0 0
      %526 = vmatpush1.bf16.msra.mxu0 %v493
      %527 = vmatprep.subr.bf16.mxu0 0
      %528 = vmatpush1.bf16.msra.mxu0 0
      %529 = vmatprep.subr.bf16.mxu0 0
      %530 = vmatpush1.bf16.msra.mxu0 0
      %531 = vmatprep.subr.bf16.mxu0 0
      %532 = vmatpush1.bf16.msra.mxu0 0
      %533 = vmatprep.subr.bf16.mxu0 0
      %534 = vmatpush1.bf16.msra.mxu0 0
      %535 = vmatprep.subr.bf16.mxu0 0
      %536 = vmatpush1.bf16.msra.mxu0 0
      %537 = vmatprep.subr.bf16.mxu0 0
      %538 = vmatpush1.bf16.msra.mxu0 0
      %539 = vmatprep.subr.bf16.mxu0 0
      %540 = vmatpush1.bf16.msra.mxu0 0
      %541 = vmatprep.subr.bf16.mxu0 0
      %542 = vmatpush1.bf16.msra.mxu0 0
      %543 = vmatprep.subr.bf16.mxu0 0
      %544 = vmatpush1.bf16.msra.mxu0 0
      %545 = vmatprep.subr.bf16.mxu0 0
      %546 = vmatpush1.bf16.msra.mxu0 0
      %547 = vmatprep.subr.bf16.mxu0 0
      %548 = vmatpush1.bf16.msra.mxu0 0
      %549 = vmatprep.subr.bf16.mxu0 0
      %550 = vmatpush1.bf16.msra.mxu0 0
      %551 = vmatprep.subr.bf16.mxu0 0
      %552 = vmatpush1.bf16.msra.mxu0 0
      %553 = vmatprep.subr.bf16.mxu0 0
      %554 = vmatpush1.bf16.msra.mxu0 0
      %555 = vmatprep.mubr.bf16.mxu0 0
      %556 = vmatmul.mubr.bf16.gmra.mrb[0].mxu0 %v521
      %v557 = vpop.f32.mrb[0].mxu0
      %v558 = vadd.f32 %v512, %v557
      %v559 = vpop.f32.mrb[0].mxu0
      %v560 = vpop.f32.mrb[0].mxu0
      %v561 = vadd.f32 %v513, %v560
      %v562 = vpop.f32.mrb[0].mxu0
      %563 = vdwg.mxu0
      %v564 = vld [vmem:[%s3] sm:$0xff]
      %v565 = vld [vmem:[%s3 + $0x8] sm:$0xff]
      %v566 = vld [vmem:[%s3 + $0x10] sm:$0xff]
      %v567 = vld [vmem:[%s3 + $0x18] sm:$0xff]
      %v568 = vld [vmem:[%s3 + $0x20] sm:$0xff]
      %v569 = vld [vmem:[%s3 + $0x28] sm:$0xff]
      %v570 = vld [vmem:[%s3 + $0x30] sm:$0xff]
      %v571 = vld [vmem:[%s3 + $0x38] sm:$0xff]
      %v572 = vld [vmem:[%s3 + $0x40] sm:$0xff]
      %v573 = vld [vmem:[%s3 + $0x48] sm:$0xff]
      %v574 = vld [vmem:[%s3 + $0x50] sm:$0xff]
      %v575 = vld [vmem:[%s3 + $0x58] sm:$0xff]
      %v576 = vld [vmem:[%s3 + $0x60] sm:$0xff]
      %v577 = vld [vmem:[%s3 + $0x68] sm:$0xff]
      %v578 = vld [vmem:[%s3 + $0x70] sm:$0xff]
      %v579 = vld [vmem:[%s3 + $0x78] sm:$0xff]
      %580 = vmatprep.subr.mxu0 0.0
      %581 = vmatpush1.msra.mxu0 %v564
      %582 = vmatprep.subr.mxu0 0.0
      %583 = vmatpush1.msra.mxu0 %v565
      %584 = vmatprep.subr.mxu0 0.0
      %585 = vmatpush1.msra.mxu0 %v566
      %586 = vmatprep.subr.mxu0 0.0
      %587 = vmatpush1.msra.mxu0 %v567
      %588 = vmatprep.subr.mxu0 0.0
      %589 = vmatpush1.msra.mxu0 %v568
      %590 = vmatprep.subr.mxu0 0.0
      %591 = vmatpush1.msra.mxu0 %v569
      %592 = vmatprep.subr.mxu0 0.0
      %593 = vmatpush1.msra.mxu0 %v570
      %594 = vmatprep.subr.mxu0 0.0
      %595 = vmatpush1.msra.mxu0 %v571
      %596 = vmatprep.subr.mxu0 0.0
      %597 = vmatpush1.msra.mxu0 %v572
      %598 = vmatprep.subr.mxu0 0.0
      %599 = vmatpush1.msra.mxu0 %v573
      %600 = vmatprep.subr.mxu0 0.0
      %601 = vmatpush1.msra.mxu0 %v574
      %602 = vmatprep.subr.mxu0 0.0
      %603 = vmatpush1.msra.mxu0 %v575
      %604 = vmatprep.subr.mxu0 0.0
      %605 = vmatpush1.msra.mxu0 %v576
      %606 = vmatprep.subr.mxu0 0.0
      %607 = vmatpush1.msra.mxu0 %v577
      %608 = vmatprep.subr.mxu0 0.0
      %609 = vmatpush1.msra.mxu0 %v578
      %610 = vmatprep.subr.mxu0 0.0
      %611 = vmatpush1.msra.mxu0 %v579
      %612 = vmatprep.subr.mxu0 0.0
      %613 = vmatpush1.msra.mxu0 0.0
      %614 = vmatprep.subr.mxu0 0.0
      %615 = vmatpush1.msra.mxu0 0.0
      %616 = vmatprep.subr.mxu0 0.0
      %617 = vmatpush1.msra.mxu0 0.0
      %618 = vmatprep.subr.mxu0 0.0
      %619 = vmatpush1.msra.mxu0 0.0
      %620 = vmatprep.subr.mxu0 0.0
      %621 = vmatpush1.msra.mxu0 0.0
      %622 = vmatprep.subr.mxu0 0.0
      %623 = vmatpush1.msra.mxu0 0.0
      %624 = vmatprep.subr.mxu0 0.0
      %625 = vmatpush1.msra.mxu0 0.0
      %626 = vmatprep.subr.mxu0 0.0
      %627 = vmatpush1.msra.mxu0 0.0
      %628 = vmatprep.subr.mxu0 0.0
      %629 = vmatpush1.msra.mxu0 0.0
      %630 = vmatprep.subr.mxu0 0.0
      %631 = vmatpush1.msra.mxu0 0.0
      %632 = vmatprep.subr.mxu0 0.0
      %633 = vmatpush1.msra.mxu0 0.0
      %634 = vmatprep.subr.mxu0 0.0
      %635 = vmatpush1.msra.mxu0 0.0
      %636 = vmatprep.subr.mxu0 0.0
      %637 = vmatpush1.msra.mxu0 0.0
      %638 = vmatprep.subr.mxu0 0.0
      %639 = vmatpush1.msra.mxu0 0.0
      %640 = vmatprep.subr.mxu0 0.0
      %641 = vmatpush1.msra.mxu0 0.0
      %642 = vmatprep.subr.mxu0 0.0
      %643 = vmatpush1.msra.mxu0 0.0
      %644 = vmatprep.mubr.f32.mxu0 0.0
      %645 = vmatmul.mubr.f32.gmra.mrb[0].mxu0 %v558
      %v646 = vpop.f32.mrb[0].mxu0
      %v647 = vadd.f32 0.0, %v646
      %v648 = vpop.f32.mrb[0].mxu0
      %649 = vmatprep.mubr.f32.mxu0 0.0
      %650 = vmatmul.mubr.f32.gmra.mrb[0].mxu0 %v561
      %v651 = vpop.f32.mrb[0].mxu0
      %v652 = vadd.f32 0.0, %v651
      %v653 = vpop.f32.mrb[0].mxu0
      %654 = vdwg.mxu0
      %v655 = vmul.f32 %v505, %v647
      %v656 = vmul.f32 %v510, %v652
      %v657 = vld [vmem:[%s4] sm:$0x1]
      %v659 = vlaneseq
      %v660 = vshrl.u32 %v659, 7
      %v661 = vsub.s32 0, %v660
      %v662 = vrot.slane %v657, %v661
      %v664 = vadd.f32 %v655, %v662
      %v665 = vadd.f32 %v656, %v662
      %v666 = vld [vmem:[%s7] sm:$0x1]
      %v668 = vlaneseq
      %v669 = vshrl.u32 %v668, 7
      %v670 = vsub.s32 0, %v669
      %v671 = vrot.slane %v666, %v670
      %v673 = vsub.f32 %v664, %v671
      %v674 = vsub.f32 %v665, %v671
      %v675 = vld [vmem:[%s8] sm:$0x1]
      %v676 = vadd.f32 %v675, 1e-05
      %v677 = vrsqrt.pop %v676
      %v679 = vlaneseq
      %v680 = vshrl.u32 %v679, 7
      %v681 = vsub.s32 0, %v680
      %v682 = vrot.slane %v677, %v681
      %v684 = vmul.f32 %v673, %v682
      %v685 = vmul.f32 %v674, %v682
      %v686 = vld [vmem:[%s5] sm:$0x1]
      %v688 = vlaneseq
      %v689 = vshrl.u32 %v688, 7
      %v690 = vsub.s32 0, %v689
      %v691 = vrot.slane %v686, %v690
      %v693 = vmul.f32 %v684, %v691
      %v694 = vmul.f32 %v685, %v691
      %v695 = vld [vmem:[%s6] sm:$0x1]
      %v697 = vlaneseq
      %v698 = vshrl.u32 %v697, 7
      %v699 = vsub.s32 0, %v698
      %v700 = vrot.slane %v695, %v699
      %v702 = vadd.f32 %v693, %v700
      %v703 = vadd.f32 %v694, %v700
      %vm704 = vcmp.gt.f32.partialorder %v702, 0.0
      %vm705 = vcmp.gt.f32.partialorder %v703, 0.0
      %v706 = vmul.f32 %v702, 0.01
      %v707 = vmul.f32 %v703, 0.01
      %v708 = vsel %vm704, %v702, %v706
      %v709 = vsel %vm705, %v703, %v707
      %v710 = vld [vmem:[%s9] sm:$0xff]
      %v711 = vld [vmem:[%s9 + $0x8] sm:$0xff]
      %v712 = vld [vmem:[%s9 + $0x10] sm:$0xff]
      %v713 = vld [vmem:[%s9 + $0x18] sm:$0xff]
      %v714 = vld [vmem:[%s9 + $0x20] sm:$0xff]
      %v715 = vld [vmem:[%s9 + $0x28] sm:$0xff]
      %v716 = vld [vmem:[%s9 + $0x30] sm:$0xff]
      %v717 = vld [vmem:[%s9 + $0x38] sm:$0xff]
      %v718 = vld [vmem:[%s9 + $0x40] sm:$0xff]
      %v719 = vld [vmem:[%s9 + $0x48] sm:$0xff]
      %v720 = vld [vmem:[%s9 + $0x50] sm:$0xff]
      %v721 = vld [vmem:[%s9 + $0x58] sm:$0xff]
      %v722 = vld [vmem:[%s9 + $0x60] sm:$0xff]
      %v723 = vld [vmem:[%s9 + $0x68] sm:$0xff]
      %v724 = vld [vmem:[%s9 + $0x70] sm:$0xff]
      %v725 = vld [vmem:[%s9 + $0x78] sm:$0xff]
      %v726 = vld [vmem:[%s10] sm:$0x1]
      %v728 = vlaneseq
      %v729 = vshrl.u32 %v728, 7
      %v730 = vsub.s32 0, %v729
      %v731 = vrot.slane %v726, %v730
      %733 = vmatprep.subr.mxu0 0.0
      %734 = vmatpush1.msra.mxu0 %v710
      %735 = vmatprep.subr.mxu0 0.0
      %736 = vmatpush1.msra.mxu0 %v711
      %737 = vmatprep.subr.mxu0 0.0
      %738 = vmatpush1.msra.mxu0 %v712
      %739 = vmatprep.subr.mxu0 0.0
      %740 = vmatpush1.msra.mxu0 %v713
      %741 = vmatprep.subr.mxu0 0.0
      %742 = vmatpush1.msra.mxu0 %v714
      %743 = vmatprep.subr.mxu0 0.0
      %744 = vmatpush1.msra.mxu0 %v715
      %745 = vmatprep.subr.mxu0 0.0
      %746 = vmatpush1.msra.mxu0 %v716
      %747 = vmatprep.subr.mxu0 0.0
      %748 = vmatpush1.msra.mxu0 %v717
      %749 = vmatprep.subr.mxu0 0.0
      %750 = vmatpush1.msra.mxu0 %v718
      %751 = vmatprep.subr.mxu0 0.0
      %752 = vmatpush1.msra.mxu0 %v719
      %753 = vmatprep.subr.mxu0 0.0
      %754 = vmatpush1.msra.mxu0 %v720
      %755 = vmatprep.subr.mxu0 0.0
      %756 = vmatpush1.msra.mxu0 %v721
      %757 = vmatprep.subr.mxu0 0.0
      %758 = vmatpush1.msra.mxu0 %v722
      %759 = vmatprep.subr.mxu0 0.0
      %760 = vmatpush1.msra.mxu0 %v723
      %761 = vmatprep.subr.mxu0 0.0
      %762 = vmatpush1.msra.mxu0 %v724
      %763 = vmatprep.subr.mxu0 0.0
      %764 = vmatpush1.msra.mxu0 %v725
      %765 = vmatprep.subr.mxu0 0.0
      %766 = vmatpush1.msra.mxu0 0.0
      %767 = vmatprep.subr.mxu0 0.0
      %768 = vmatpush1.msra.mxu0 0.0
      %769 = vmatprep.subr.mxu0 0.0
      %770 = vmatpush1.msra.mxu0 0.0
      %771 = vmatprep.subr.mxu0 0.0
      %772 = vmatpush1.msra.mxu0 0.0
      %773 = vmatprep.subr.mxu0 0.0
      %774 = vmatpush1.msra.mxu0 0.0
      %775 = vmatprep.subr.mxu0 0.0
      %776 = vmatpush1.msra.mxu0 0.0
      %777 = vmatprep.subr.mxu0 0.0
      %778 = vmatpush1.msra.mxu0 0.0
      %779 = vmatprep.subr.mxu0 0.0
      %780 = vmatpush1.msra.mxu0 0.0
      %781 = vmatprep.subr.mxu0 0.0
      %782 = vmatpush1.msra.mxu0 0.0
      %783 = vmatprep.subr.mxu0 0.0
      %784 = vmatpush1.msra.mxu0 0.0
      %785 = vmatprep.subr.mxu0 0.0
      %786 = vmatpush1.msra.mxu0 0.0
      %787 = vmatprep.subr.mxu0 0.0
      %788 = vmatpush1.msra.mxu0 0.0
      %789 = vmatprep.subr.mxu0 0.0
      %790 = vmatpush1.msra.mxu0 0.0
      %791 = vmatprep.subr.mxu0 0.0
      %792 = vmatpush1.msra.mxu0 0.0
      %793 = vmatprep.subr.mxu0 0.0
      %794 = vmatpush1.msra.mxu0 0.0
      %795 = vmatprep.subr.mxu0 0.0
      %796 = vmatpush1.msra.mxu0 0.0
      %797 = vmatprep.mubr.f32.mxu0 0.0
      %798 = vmatmul.mubr.f32.gmra.mrb[0].mxu0 %v708
      %v799 = vpop.f32.mrb[0].mxu0
      %v800 = vadd.f32 %v731, %v799
      %v801 = vpop.f32.mrb[0].mxu0
      %802 = vmatprep.mubr.f32.mxu0 0.0
      %803 = vmatmul.mubr.f32.gmra.mrb[0].mxu0 %v709
      %v804 = vpop.f32.mrb[0].mxu0
      %v805 = vadd.f32 %v731, %v804
      %v806 = vpop.f32.mrb[0].mxu0
      %807 = vdwg.mxu0
      %v808 = vld [vmem:[%s11] sm:$0xff]
      %v809 = vld [vmem:[%s11 + $0x8] sm:$0xff]
      %v810 = vld [vmem:[%s11 + $0x10] sm:$0xff]
      %v811 = vld [vmem:[%s11 + $0x18] sm:$0xff]
      %v812 = vld [vmem:[%s11 + $0x20] sm:$0xff]
      %v813 = vld [vmem:[%s11 + $0x28] sm:$0xff]
      %v814 = vld [vmem:[%s11 + $0x30] sm:$0xff]
      %v815 = vld [vmem:[%s11 + $0x38] sm:$0xff]
      %v816 = vld [vmem:[%s11 + $0x40] sm:$0xff]
      %v817 = vld [vmem:[%s11 + $0x48] sm:$0xff]
      %v818 = vld [vmem:[%s11 + $0x50] sm:$0xff]
      %v819 = vld [vmem:[%s11 + $0x58] sm:$0xff]
      %v820 = vld [vmem:[%s11 + $0x60] sm:$0xff]
      %v821 = vld [vmem:[%s11 + $0x68] sm:$0xff]
      %v822 = vld [vmem:[%s11 + $0x70] sm:$0xff]
      %v823 = vld [vmem:[%s11 + $0x78] sm:$0xff]
      %v824 = vmul.f32 %v808, %v808
      %v825 = vmul.f32 %v809, %v809
      %v826 = vmul.f32 %v810, %v810
      %v827 = vmul.f32 %v811, %v811
      %v828 = vmul.f32 %v812, %v812
      %v829 = vmul.f32 %v813, %v813
      %v830 = vmul.f32 %v814, %v814
      %v831 = vmul.f32 %v815, %v815
      %v832 = vmul.f32 %v816, %v816
      %v833 = vmul.f32 %v817, %v817
      %v834 = vmul.f32 %v818, %v818
      %v835 = vmul.f32 %v819, %v819
      %v836 = vmul.f32 %v820, %v820
      %v837 = vmul.f32 %v821, %v821
      %v838 = vmul.f32 %v822, %v822
      %v839 = vmul.f32 %v823, %v823
      %vm840 = vcmask 7168
      %v841 = vsel %vm840, %v824, 0.0
      %v842 = vsel %vm840, %v825, 0.0
      %v843 = vadd.f32 %v841, %v842
      %v844 = vsel %vm840, %v826, 0.0
      %v845 = vadd.f32 %v843, %v844
      %v846 = vsel %vm840, %v827, 0.0
      %v847 = vadd.f32 %v845, %v846
      %v848 = vsel %vm840, %v828, 0.0
      %v849 = vadd.f32 %v847, %v848
      %v850 = vsel %vm840, %v829, 0.0
      %v851 = vadd.f32 %v849, %v850
      %v852 = vsel %vm840, %v830, 0.0
      %v853 = vadd.f32 %v851, %v852
      %v854 = vsel %vm840, %v831, 0.0
      %v855 = vadd.f32 %v853, %v854
      %v856 = vsel %vm840, %v832, 0.0
      %v857 = vadd.f32 %v855, %v856
      %v858 = vsel %vm840, %v833, 0.0
      %v859 = vadd.f32 %v857, %v858
      %v860 = vsel %vm840, %v834, 0.0
      %v861 = vadd.f32 %v859, %v860
      %v862 = vsel %vm840, %v835, 0.0
      %v863 = vadd.f32 %v861, %v862
      %v864 = vsel %vm840, %v836, 0.0
      %v865 = vadd.f32 %v863, %v864
      %v866 = vsel %vm840, %v837, 0.0
      %v867 = vadd.f32 %v865, %v866
      %v868 = vsel %vm840, %v838, 0.0
      %v869 = vadd.f32 %v867, %v868
      %v870 = vsel %vm840, %v839, 0.0
      %v871 = vadd.f32 %v869, %v870
      %872 = vadd.xlane.f32.xlu0 %v871
      %v873 = vpop.xlane.xlu0 %872
      %v874 = vrot.slane %v873, 4
      %v875 = vadd.f32 %v873, %v874
      %v876 = vrot.slane %v875, 2
      %v877 = vadd.f32 %v875, %v876
      %v878 = vrot.slane %v877, 1
      %v879 = vadd.f32 %v877, %v878
      %s880 = vtos %v879
      %v881 = vstv %s880
      %v882 = vrsqrt.pop %v881
      %883 = vmatprep.subr.mxu0 0.0
      %884 = vmatpush1.msra.mxu0 %v808
      %885 = vmatprep.subr.mxu0 0.0
      %886 = vmatpush1.msra.mxu0 %v809
      %887 = vmatprep.subr.mxu0 0.0
      %888 = vmatpush1.msra.mxu0 %v810
      %889 = vmatprep.subr.mxu0 0.0
      %890 = vmatpush1.msra.mxu0 %v811
      %891 = vmatprep.subr.mxu0 0.0
      %892 = vmatpush1.msra.mxu0 %v812
      %893 = vmatprep.subr.mxu0 0.0
      %894 = vmatpush1.msra.mxu0 %v813
      %895 = vmatprep.subr.mxu0 0.0
      %896 = vmatpush1.msra.mxu0 %v814
      %897 = vmatprep.subr.mxu0 0.0
      %898 = vmatpush1.msra.mxu0 %v815
      %899 = vmatprep.subr.mxu0 0.0
      %900 = vmatpush1.msra.mxu0 %v816
      %901 = vmatprep.subr.mxu0 0.0
      %902 = vmatpush1.msra.mxu0 %v817
      %903 = vmatprep.subr.mxu0 0.0
      %904 = vmatpush1.msra.mxu0 %v818
      %905 = vmatprep.subr.mxu0 0.0
      %906 = vmatpush1.msra.mxu0 %v819
      %907 = vmatprep.subr.mxu0 0.0
      %908 = vmatpush1.msra.mxu0 %v820
      %909 = vmatprep.subr.mxu0 0.0
      %910 = vmatpush1.msra.mxu0 %v821
      %911 = vmatprep.subr.mxu0 0.0
      %912 = vmatpush1.msra.mxu0 %v822
      %913 = vmatprep.subr.mxu0 0.0
      %914 = vmatpush1.msra.mxu0 %v823
      %915 = vmatprep.subr.mxu0 0.0
      %916 = vmatpush1.msra.mxu0 0.0
      %917 = vmatprep.subr.mxu0 0.0
      %918 = vmatpush1.msra.mxu0 0.0
      %919 = vmatprep.subr.mxu0 0.0
      %920 = vmatpush1.msra.mxu0 0.0
      %921 = vmatprep.subr.mxu0 0.0
      %922 = vmatpush1.msra.mxu0 0.0
      %923 = vmatprep.subr.mxu0 0.0
      %924 = vmatpush1.msra.mxu0 0.0
      %925 = vmatprep.subr.mxu0 0.0
      %926 = vmatpush1.msra.mxu0 0.0
      %927 = vmatprep.subr.mxu0 0.0
      %928 = vmatpush1.msra.mxu0 0.0
      %929 = vmatprep.subr.mxu0 0.0
      %930 = vmatpush1.msra.mxu0 0.0
      %931 = vmatprep.subr.mxu0 0.0
      %932 = vmatpush1.msra.mxu0 0.0
      %933 = vmatprep.subr.mxu0 0.0
      %934 = vmatpush1.msra.mxu0 0.0
      %935 = vmatprep.subr.mxu0 0.0
      %936 = vmatpush1.msra.mxu0 0.0
      %937 = vmatprep.subr.mxu0 0.0
      %938 = vmatpush1.msra.mxu0 0.0
      %939 = vmatprep.subr.mxu0 0.0
      %940 = vmatpush1.msra.mxu0 0.0
      %941 = vmatprep.subr.mxu0 0.0
      %942 = vmatpush1.msra.mxu0 0.0
      %943 = vmatprep.subr.mxu0 0.0
      %944 = vmatpush1.msra.mxu0 0.0
      %945 = vmatprep.subr.mxu0 0.0
      %946 = vmatpush1.msra.mxu0 0.0
      %947 = vmatprep.mubr.f32.mxu0 0.0
      %948 = vmatmul.mubr.f32.gmra.mrb[0].mxu0 %v800
      %v949 = vpop.f32.mrb[0].mxu0
      %v950 = vadd.f32 0.0, %v949
      %v951 = vpop.f32.mrb[0].mxu0
      %952 = vmatprep.mubr.f32.mxu0 0.0
      %953 = vmatmul.mubr.f32.gmra.mrb[0].mxu0 %v805
      %v954 = vpop.f32.mrb[0].mxu0
      %v955 = vadd.f32 0.0, %v954
      %v956 = vpop.f32.mrb[0].mxu0
      %957 = vdwg.mxu0
      %v958 = vmul.f32 %v950, %v882
      %v959 = vmul.f32 %v955, %v882
      %v960 = vtanh.pop %v958
      %v961 = vtanh.pop %v959
      %963 = vset.pattern.permute.xlu0 0
      %964 = vperm.xlu0 %963, %v960
      %v965 = vpop.permute.xlu0 %964
      %968 = vset.pattern.permute.xlu0 0
      %969 = vperm.xlu0 %968, %v961
      %v970 = vpop.permute.xlu0 %969
      %v972 = vmul.f32 %v800, %v965
      %v973 = vmul.f32 %v805, %v970
      %974 = vst [vmem:[%s450] sm:$0xff] %v972
      %975 = vst [vmem:[%s450 + $0x8] sm:$0xff] %v973
      %976 = vst.msk [vmem:[%s456] sm:$0xff] %vm840, %v960
      %977 = vst.msk [vmem:[%s456 + $0x8] sm:$0xff] %vm840, %v961
      %s978 = smul.u32 2, %s25
      %p979 = scmp.lt.s32.totalorder %s978, 3
      %s980 = scalar_select %p979, %s978, 3
      %s981 = smul.addr %s980, 8
      %s982 = scalar_lea.vmem %s12, %s981
      %s983 = smul.u32 2, %s25
      %p984 = scmp.lt.s32.totalorder %s983, 3
      %s985 = scalar_select %p984, %s983, 3
      %s986 = smul.addr %s985, 8
      %s987 = scalar_lea.vmem %s13, %s986
      // Predicated region
      $region69: #{agnn_efg_forward.3} parent=67 // pred_check
        %p988 = pneg %p300
      $region70: #{agnn_efg_forward.3} parent=67 // pred_check_branch
        %990 = sbr.rel (%p988) target = $region72
      $region71: #{agnn_efg_forward.3} parent=67 // pred_region
        %s991 = smul.u32 2, %s25
      $region72: #{agnn_efg_forward.3} parent=67 // pred_fallthru
        _
      // Predicated region
      $region73: #{agnn_efg_forward.3} parent=67 // pred_check
        %p992 = pneg %p326
      $region74: #{agnn_efg_forward.3} parent=67 // pred_check_branch
        %994 = sbr.rel (%p992) target = $region76
      $region75: #{agnn_efg_forward.3} parent=67 // pred_region
        %s995 = smul.u32 2, %s25
      $region76: #{agnn_efg_forward.3} parent=67 // pred_fallthru
        _
    $region68: #{agnn_efg_forward.3} parent=5 // pred_fallthru
      _
    %p996 = scmp.le.s32.totalorder 2, %s20
    // Predicated region
    $region77: #{agnn_efg_forward.3} parent=5 // pred_check
      %p997 = pneg %p996
    $region78: #{agnn_efg_forward.3} parent=5 // pred_check_branch
      %999 = sbr.rel (%p997) target = $region80
    $region79: #{agnn_efg_forward.3} parent=5 // pred_region
      %s1000 = ssub.s32 %s20, 2
      // Predicated region
      $region81: #{agnn_efg_forward.3} parent=79 // pred_check
        %p1001 = pneg %p306
      $region82: #{agnn_efg_forward.3} parent=79 // pred_check_branch
        %1003 = sbr.rel (%p1001) target = $region84
      $region83: #{agnn_efg_forward.3} parent=79 // pred_region
        %s1004 = smul.u32 2, %s26
        %p1005 = scmp.lt.s32.totalorder %s1004, 3
        %s1006 = scalar_select %p1005, %s1004, 3
        %s1007 = smul.addr %s1006, 8
        %s1008 = scalar_lea.vmem %s12, %s1007
      $region84: #{agnn_efg_forward.3} parent=79 // pred_fallthru
        _
      // Predicated region
      $region85: #{agnn_efg_forward.3} parent=79 // pred_check
        %p1009 = pneg %p332
      $region86: #{agnn_efg_forward.3} parent=79 // pred_check_branch
        %1011 = sbr.rel (%p1009) target = $region88
      $region87: #{agnn_efg_forward.3} parent=79 // pred_region
        %s1012 = smul.u32 2, %s26
        %p1013 = scmp.lt.s32.totalorder %s1012, 3
        %s1014 = scalar_select %p1013, %s1012, 3
        %s1015 = smul.addr %s1014, 8
        %s1016 = scalar_lea.vmem %s13, %s1015
      $region88: #{agnn_efg_forward.3} parent=79 // pred_fallthru
        _
    $region80: #{agnn_efg_forward.3} parent=5 // pred_fallthru
      _
  $region6: #{agnn_efg_forward.3} parent=0 // loop_footer
    %s24 = sadd.s32 1, %s20
  $region7: #{agnn_efg_forward.3} parent=0 // loop_footer_branch
    %19 = sbr.rel target = $region3
  $region8: #{agnn_efg_forward.3} parent=0 // loop_exit
    _

// kernel: agnn_efg_forward.4
$region0: #{agnn_efg_forward.4}
  #allocation0 [shape = 'u32[]', space=smem, size = 0x4, offset = 0x4, fixed_abs, tag = 'smem constant byte address 0x4 - core index']
  #allocation1 [shape = 'u32[144,128]{1,0:T(1,128)}', space=vmem, size = 0x12000, scoped, tag = 'internal scratch']
  %s0 = inlined_call_operand.vmem [shape: f32[16,16], index: 0, kind: input, shape index: {}]
  %s1 = inlined_call_operand.vmem [shape: f32[16,128], index: 1, kind: input, shape index: {}]
  %s2 = inlined_call_operand.vmem [shape: f32[128,128], index: 2, kind: input, shape index: {}]
  %s3 = inlined_call_operand.vmem [shape: f32[128,128], index: 3, kind: input, shape index: {}]
  %s4 = inlined_call_operand.vmem [shape: f32[1,128], index: 4, kind: input, shape index: {}]
  %s5 = inlined_call_operand.vmem [shape: f32[1,128], index: 5, kind: input, shape index: {}]
  %s6 = inlined_call_operand.vmem [shape: f32[128,1], index: 6, kind: input, shape index: {}]
  %s7 = inlined_call_operand.vmem [shape: f32[16,128], index: 7, kind: output, shape index: {0}]
  %s8 = inlined_call_operand.vmem [shape: f32[16,1], index: 8, kind: output, shape index: {1}]
  %9 = xla_tuple %s7, %s8
  %s10 = sld [smem:[#allocation0]]
  $region69: #{agnn_efg_forward.4} parent=0
    _
  %s12 = ssub.s32 1, %s10
  %s13 = scalar_select 0, %s12, %s10
  loop: start=0, step=1, limit=4
  $region2: #{agnn_efg_forward.4} parent=0 // loop_pre_header
    _
  $region3: #{agnn_efg_forward.4} parent=0 // loop_header
    %s15 = sphi 0, %s19
    %p16 = scmp.ge.s32.totalorder %s15, 4
    %s25 = sphi 0, %s27
    %s28 = sphi 0, %s25
    %s29 = sphi 0, %s28
    %s45 = sphi 0, %s29
    %s49 = sphi 0, %s49
    %s51 = sphi 0, %s49
    %s52 = sphi 0, %s51
    %s66 = sphi 0, %s52
    %s70 = sphi 0, %s70
    %s72 = sphi 0, %s70
    %s73 = sphi 0, %s72
    %s87 = sphi 0, %s73
    %s91 = sphi 0, %s91
    %s93 = sphi 0, %s91
    %s94 = sphi 0, %s93
    %s108 = sphi 0, %s94
    %s112 = sphi 0, %s112
    %s114 = sphi 0, %s112
    %s115 = sphi 0, %s114
    %s129 = sphi 0, %s115
    %s133 = sphi 0, %s133
    %s135 = sphi 0, %s133
    %s136 = sphi 0, %s135
    %s150 = sphi 0, %s136
    %s154 = sphi 0, %s154
    %s156 = sphi 0, %s154
    %s157 = sphi 0, %s156
    %s171 = sphi 0, %s157
    %s177 = sphi 0, %s179
    %s180 = sphi 0, %s177
    %s181 = sphi 0, %s180
    %s197 = sphi 0, %s181
    %s203 = sphi 0, %s205
    %s206 = sphi 0, %s203
    %s207 = sphi 0, %s206
    %s223 = sphi 0, %s207
  $region4: #{agnn_efg_forward.4} parent=0 // loop_header_branch
    %18 = sbr.rel (%p16) target = $region8
  $region5: #{agnn_efg_forward.4} parent=0 // loop_body
    %s20 = ssub.s32 %s15, 1
    %s21 = ssub.s32 %s15, 2
    %s22 = sadd.s32 %s15, 1
    %s23 = ssub.s32 %s15, %s22
    %p24 = scmp.eq.s32.totalorder %s23, 0
    %s26 = sadd.s32 %s25, 1
    %s27 = scalar_select %p24, %s25, %s26
    %p30 = pneg %p24
    %p31 = scmp.eq.s32.totalorder %s15, 1
    %p32 = por %p30, %p31
    %p33 = scmp.ne.s32.totalorder %s25, %s28
    %p34 = scmp.eq.s32.totalorder %s15, 0
    %p35 = por %p33, %p34
    %p36 = scmp.ne.s32.totalorder %s25, %s28
    %p37 = scmp.eq.s32.totalorder %s20, 1
    %p38 = por %p36, %p37
    %p39 = scmp.ne.s32.totalorder %s28, %s29
    %p40 = scmp.eq.s32.totalorder %s20, 0
    %p41 = por %p39, %p40
    %p42 = scmp.ne.s32.totalorder %s28, %s29
    %p43 = scmp.eq.s32.totalorder %s21, 1
    %p44 = por %p42, %p43
    %p46 = scmp.ne.s32.totalorder %s29, %s45
    %p47 = scmp.eq.s32.totalorder %s21, 0
    %p48 = por %p46, %p47
    %s50 = sadd.s32 %s49, 1
    %p53 = scmp.eq.s32.totalorder %s15, 1
    %p54 = scmp.ne.s32.totalorder %s49, %s51
    %p55 = scmp.eq.s32.totalorder %s15, 0
    %p56 = por %p54, %p55
    %p57 = scmp.ne.s32.totalorder %s49, %s51
    %p58 = scmp.eq.s32.totalorder %s20, 1
    %p59 = por %p57, %p58
    %p60 = scmp.ne.s32.totalorder %s51, %s52
    %p61 = scmp.eq.s32.totalorder %s20, 0
    %p62 = por %p60, %p61
    %p63 = scmp.ne.s32.totalorder %s51, %s52
    %p64 = scmp.eq.s32.totalorder %s21, 1
    %p65 = por %p63, %p64
    %p67 = scmp.ne.s32.totalorder %s52, %s66
    %p68 = scmp.eq.s32.totalorder %s21, 0
    %p69 = por %p67, %p68
    %s71 = sadd.s32 %s70, 1
    %p74 = scmp.eq.s32.totalorder %s15, 1
    %p75 = scmp.ne.s32.totalorder %s70, %s72
    %p76 = scmp.eq.s32.totalorder %s15, 0
    %p77 = por %p75, %p76
    %p78 = scmp.ne.s32.totalorder %s70, %s72
    %p79 = scmp.eq.s32.totalorder %s20, 1
    %p80 = por %p78, %p79
    %p81 = scmp.ne.s32.totalorder %s72, %s73
    %p82 = scmp.eq.s32.totalorder %s20, 0
    %p83 = por %p81, %p82
    %p84 = scmp.ne.s32.totalorder %s72, %s73
    %p85 = scmp.eq.s32.totalorder %s21, 1
    %p86 = por %p84, %p85
    %p88 = scmp.ne.s32.totalorder %s73, %s87
    %p89 = scmp.eq.s32.totalorder %s21, 0
    %p90 = por %p88, %p89
    %s92 = sadd.s32 %s91, 1
    %p95 = scmp.eq.s32.totalorder %s15, 1
    %p96 = scmp.ne.s32.totalorder %s91, %s93
    %p97 = scmp.eq.s32.totalorder %s15, 0
    %p98 = por %p96, %p97
    %p99 = scmp.ne.s32.totalorder %s91, %s93
    %p100 = scmp.eq.s32.totalorder %s20, 1
    %p101 = por %p99, %p100
    %p102 = scmp.ne.s32.totalorder %s93, %s94
    %p103 = scmp.eq.s32.totalorder %s20, 0
    %p104 = por %p102, %p103
    %p105 = scmp.ne.s32.totalorder %s93, %s94
    %p106 = scmp.eq.s32.totalorder %s21, 1
    %p107 = por %p105, %p106
    %p109 = scmp.ne.s32.totalorder %s94, %s108
    %p110 = scmp.eq.s32.totalorder %s21, 0
    %p111 = por %p109, %p110
    %s113 = sadd.s32 %s112, 1
    %p116 = scmp.eq.s32.totalorder %s15, 1
    %p117 = scmp.ne.s32.totalorder %s112, %s114
    %p118 = scmp.eq.s32.totalorder %s15, 0
    %p119 = por %p117, %p118
    %p120 = scmp.ne.s32.totalorder %s112, %s114
    %p121 = scmp.eq.s32.totalorder %s20, 1
    %p122 = por %p120, %p121
    %p123 = scmp.ne.s32.totalorder %s114, %s115
    %p124 = scmp.eq.s32.totalorder %s20, 0
    %p125 = por %p123, %p124
    %p126 = scmp.ne.s32.totalorder %s114, %s115
    %p127 = scmp.eq.s32.totalorder %s21, 1
    %p128 = por %p126, %p127
    %p130 = scmp.ne.s32.totalorder %s115, %s129
    %p131 = scmp.eq.s32.totalorder %s21, 0
    %p132 = por %p130, %p131
    %s134 = sadd.s32 %s133, 1
    %p137 = scmp.eq.s32.totalorder %s15, 1
    %p138 = scmp.ne.s32.totalorder %s133, %s135
    %p139 = scmp.eq.s32.totalorder %s15, 0
    %p140 = por %p138, %p139
    %p141 = scmp.ne.s32.totalorder %s133, %s135
    %p142 = scmp.eq.s32.totalorder %s20, 1
    %p143 = por %p141, %p142
    %p144 = scmp.ne.s32.totalorder %s135, %s136
    %p145 = scmp.eq.s32.totalorder %s20, 0
    %p146 = por %p144, %p145
    %p147 = scmp.ne.s32.totalorder %s135, %s136
    %p148 = scmp.eq.s32.totalorder %s21, 1
    %p149 = por %p147, %p148
    %p151 = scmp.ne.s32.totalorder %s136, %s150
    %p152 = scmp.eq.s32.totalorder %s21, 0
    %p153 = por %p151, %p152
    %s155 = sadd.s32 %s154, 1
    %p158 = scmp.eq.s32.totalorder %s15, 1
    %p159 = scmp.ne.s32.totalorder %s154, %s156
    %p160 = scmp.eq.s32.totalorder %s15, 0
    %p161 = por %p159, %p160
    %p162 = scmp.ne.s32.totalorder %s154, %s156
    %p163 = scmp.eq.s32.totalorder %s20, 1
    %p164 = por %p162, %p163
    %p165 = scmp.ne.s32.totalorder %s156, %s157
    %p166 = scmp.eq.s32.totalorder %s20, 0
    %p167 = por %p165, %p166
    %p168 = scmp.ne.s32.totalorder %s156, %s157
    %p169 = scmp.eq.s32.totalorder %s21, 1
    %p170 = por %p168, %p169
    %p172 = scmp.ne.s32.totalorder %s157, %s171
    %p173 = scmp.eq.s32.totalorder %s21, 0
    %p174 = por %p172, %p173
    %s175 = ssub.s32 %s15, %s22
    %p176 = scmp.eq.s32.totalorder %s175, 0
    %s178 = sadd.s32 %s177, 1
    %s179 = scalar_select %p176, %s177, %s178
    %p182 = pneg %p176
    %p183 = scmp.eq.s32.totalorder %s15, 1
    %p184 = por %p182, %p183
    %p185 = scmp.ne.s32.totalorder %s177, %s180
    %p186 = scmp.eq.s32.totalorder %s15, 0
    %p187 = por %p185, %p186
    %p188 = scmp.ne.s32.totalorder %s177, %s180
    %p189 = scmp.eq.s32.totalorder %s20, 1
    %p190 = por %p188, %p189
    %p191 = scmp.ne.s32.totalorder %s180, %s181
    %p192 = scmp.eq.s32.totalorder %s20, 0
    %p193 = por %p191, %p192
    %p194 = scmp.ne.s32.totalorder %s180, %s181
    %p195 = scmp.eq.s32.totalorder %s21, 1
    %p196 = por %p194, %p195
    %p198 = scmp.ne.s32.totalorder %s181, %s197
    %p199 = scmp.eq.s32.totalorder %s21, 0
    %p200 = por %p198, %p199
    %s201 = ssub.s32 %s15, %s22
    %p202 = scmp.eq.s32.totalorder %s201, 0
    %s204 = sadd.s32 %s203, 1
    %s205 = scalar_select %p202, %s203, %s204
    %p208 = pneg %p202
    %p209 = scmp.eq.s32.totalorder %s15, 1
    %p210 = por %p208, %p209
    %p211 = scmp.ne.s32.totalorder %s203, %s206
    %p212 = scmp.eq.s32.totalorder %s15, 0
    %p213 = por %p211, %p212
    %p214 = scmp.ne.s32.totalorder %s203, %s206
    %p215 = scmp.eq.s32.totalorder %s20, 1
    %p216 = por %p214, %p215
    %p217 = scmp.ne.s32.totalorder %s206, %s207
    %p218 = scmp.eq.s32.totalorder %s20, 0
    %p219 = por %p217, %p218
    %p220 = scmp.ne.s32.totalorder %s206, %s207
    %p221 = scmp.eq.s32.totalorder %s21, 1
    %p222 = por %p220, %p221
    %p224 = scmp.ne.s32.totalorder %s207, %s223
    %p225 = scmp.eq.s32.totalorder %s21, 0
    %p226 = por %p224, %p225
    %p227 = scmp.le.s32.totalorder 1, %s15
    %p228 = scmp.lt.s32.totalorder %s15, 3
    %p229 = pnand %p227, %p228
    %p230 = pneg %p229
    // Predicated region
    $region9: #{agnn_efg_forward.4} parent=5 // pred_check
      _
    $region10: #{agnn_efg_forward.4} parent=5 // pred_check_branch
      %232 = sbr.rel (%p229) target = $region12
    $region11: #{agnn_efg_forward.4} parent=5 // pred_region
      %s233 = ssub.s32 %s15, 1
      // Predicated region
      $region13: #{agnn_efg_forward.4} parent=11 // pred_check
        %p234 = pneg %p62
      $region14: #{agnn_efg_forward.4} parent=11 // pred_check_branch
        %236 = sbr.rel (%p234) target = $region16
      $region15: #{agnn_efg_forward.4} parent=11 // pred_region
        _
      $region16: #{agnn_efg_forward.4} parent=11 // pred_fallthru
        _
      // Predicated region
      $region17: #{agnn_efg_forward.4} parent=11 // pred_check
        %p237 = pneg %p83
      $region18: #{agnn_efg_forward.4} parent=11 // pred_check_branch
        %239 = sbr.rel (%p237) target = $region20
      $region19: #{agnn_efg_forward.4} parent=11 // pred_region
        _
      $region20: #{agnn_efg_forward.4} parent=11 // pred_fallthru
        _
      // Predicated region
      $region21: #{agnn_efg_forward.4} parent=11 // pred_check
        %p240 = pneg %p104
      $region22: #{agnn_efg_forward.4} parent=11 // pred_check_branch
        %242 = sbr.rel (%p240) target = $region24
      $region23: #{agnn_efg_forward.4} parent=11 // pred_region
        _
      $region24: #{agnn_efg_forward.4} parent=11 // pred_fallthru
        _
      // Predicated region
      $region25: #{agnn_efg_forward.4} parent=11 // pred_check
        %p243 = pneg %p125
      $region26: #{agnn_efg_forward.4} parent=11 // pred_check_branch
        %245 = sbr.rel (%p243) target = $region28
      $region27: #{agnn_efg_forward.4} parent=11 // pred_region
        _
      $region28: #{agnn_efg_forward.4} parent=11 // pred_fallthru
        _
      // Predicated region
      $region29: #{agnn_efg_forward.4} parent=11 // pred_check
        %p246 = pneg %p146
      $region30: #{agnn_efg_forward.4} parent=11 // pred_check_branch
        %248 = sbr.rel (%p246) target = $region32
      $region31: #{agnn_efg_forward.4} parent=11 // pred_region
        _
      $region32: #{agnn_efg_forward.4} parent=11 // pred_fallthru
        _
      // Predicated region
      $region33: #{agnn_efg_forward.4} parent=11 // pred_check
        %p249 = pneg %p167
      $region34: #{agnn_efg_forward.4} parent=11 // pred_check_branch
        %251 = sbr.rel (%p249) target = $region36
      $region35: #{agnn_efg_forward.4} parent=11 // pred_region
        _
      $region36: #{agnn_efg_forward.4} parent=11 // pred_fallthru
        _
    $region12: #{agnn_efg_forward.4} parent=5 // pred_fallthru
      _
    %p252 = scmp.lt.s32.totalorder %s15, 2
    // Predicated region
    $region37: #{agnn_efg_forward.4} parent=5 // pred_check
      %p253 = pneg %p252
    $region38: #{agnn_efg_forward.4} parent=5 // pred_check_branch
      %255 = sbr.rel (%p253) target = $region40
    $region39: #{agnn_efg_forward.4} parent=5 // pred_region
      // Predicated region
      $region41: #{agnn_efg_forward.4} parent=39 // pred_check
        %p256 = pneg %p35
      $region42: #{agnn_efg_forward.4} parent=39 // pred_check_branch
        %258 = sbr.rel (%p256) target = $region44
      $region43: #{agnn_efg_forward.4} parent=39 // pred_region
        %p259 = scmp.lt.s32.totalorder %s15, 1
        %s260 = scalar_select %p259, %s15, 1
        %s261 = smul.addr %s260, 8
        %s262 = scalar_lea.vmem %s0, %s261
      $region44: #{agnn_efg_forward.4} parent=39 // pred_fallthru
        _
    $region40: #{agnn_efg_forward.4} parent=5 // pred_fallthru
      _
    %p263 = scmp.le.s32.totalorder 1, %s15
    %p264 = scmp.lt.s32.totalorder %s15, 3
    %p265 = pnand %p263, %p264
    %p266 = pneg %p265
    // Predicated region
    $region45: #{agnn_efg_forward.4} parent=5 // pred_check
      _
    $region46: #{agnn_efg_forward.4} parent=5 // pred_check_branch
      %268 = sbr.rel (%p265) target = $region48
    $region47: #{agnn_efg_forward.4} parent=5 // pred_region
      %s269 = ssub.s32 %s15, 1
      %p270 = scmp.lt.s32.totalorder %s20, 1
      %s271 = scalar_select %p270, %s20, 1
      %s272 = smul.addr %s271, 8
      %s273 = scalar_lea.vmem %s0, %s272
      %p274 = pneg %p41
      %p275 = pneg %p38
      %p276 = pneg %p62
      %p277 = pneg %p59
      %p278 = pneg %p83
      %p279 = pneg %p80
      %p280 = pneg %p104
      %p281 = pneg %p101
      %p282 = pneg %p125
      %p283 = pneg %p122
      %p284 = pneg %p146
      %p285 = pneg %p143
      %p286 = pneg %p167
      %p287 = pneg %p164
      %p288 = pneg %p193
      %p289 = pneg %p190
      %p290 = scmp.lt.s32.totalorder %s20, 1
      %s291 = scalar_select %p290, %s20, 1
      %s292 = smul.addr %s291, 8
      %s293 = scalar_lea.vmem %s7, %s292
      %p294 = pneg %p219
      %p295 = pneg %p216
      %p296 = scmp.lt.s32.totalorder %s20, 1
      %s297 = scalar_select %p296, %s20, 1
      %s298 = smul.addr %s297, 8
      %s299 = scalar_lea.vmem %s8, %s298
      %p300 = scmp.lt.s32.totalorder %s20, 1
      %s301 = scalar_select %p300, %s20, 1
      %s302 = smul.addr %s301, 8
      %s303 = scalar_lea.vmem %s0, %s302
      %p304 = scmp.lt.s32.totalorder %s20, 1
      %s305 = scalar_select %p304, %s20, 1
      %s306 = smul.addr %s305, 8
      %s307 = scalar_lea.vmem %s7, %s306
      %p308 = scmp.lt.s32.totalorder %s20, 1
      %s309 = scalar_select %p308, %s20, 1
      %s310 = smul.addr %s309, 8
      %s311 = scalar_lea.vmem %s8, %s310
      %s312 = smul.u32 %s20, 8
      %v313 = vld [vmem:[%s1] sm:$0xff]
      %v314 = vld [vmem:[%s1 + $0x8] sm:$0xff]
      %v315 = vld [vmem:[%s2] sm:$0xff]
      %v316 = vld [vmem:[%s2 + $0x8] sm:$0xff]
      %v317 = vld [vmem:[%s2 + $0x10] sm:$0xff]
      %v318 = vld [vmem:[%s2 + $0x18] sm:$0xff]
      %v319 = vld [vmem:[%s2 + $0x20] sm:$0xff]
      %v320 = vld [vmem:[%s2 + $0x28] sm:$0xff]
      %v321 = vld [vmem:[%s2 + $0x30] sm:$0xff]
      %v322 = vld [vmem:[%s2 + $0x38] sm:$0xff]
      %v323 = vld [vmem:[%s2 + $0x40] sm:$0xff]
      %v324 = vld [vmem:[%s2 + $0x48] sm:$0xff]
      %v325 = vld [vmem:[%s2 + $0x50] sm:$0xff]
      %v326 = vld [vmem:[%s2 + $0x58] sm:$0xff]
      %v327 = vld [vmem:[%s2 + $0x60] sm:$0xff]
      %v328 = vld [vmem:[%s2 + $0x68] sm:$0xff]
      %v329 = vld [vmem:[%s2 + $0x70] sm:$0xff]
      %v330 = vld [vmem:[%s2 + $0x78] sm:$0xff]
      %331 = vmatprep.subr.mxu0 0.0
      %332 = vmatpush1.msra.mxu0 %v315
      %333 = vmatprep.subr.mxu0 0.0
      %334 = vmatpush1.msra.mxu0 %v316
      %335 = vmatprep.subr.mxu0 0.0
      %336 = vmatpush1.msra.mxu0 %v317
      %337 = vmatprep.subr.mxu0 0.0
      %338 = vmatpush1.msra.mxu0 %v318
      %339 = vmatprep.subr.mxu0 0.0
      %340 = vmatpush1.msra.mxu0 %v319
      %341 = vmatprep.subr.mxu0 0.0
      %342 = vmatpush1.msra.mxu0 %v320
      %343 = vmatprep.subr.mxu0 0.0
      %344 = vmatpush1.msra.mxu0 %v321
      %345 = vmatprep.subr.mxu0 0.0
      %346 = vmatpush1.msra.mxu0 %v322
      %347 = vmatprep.subr.mxu0 0.0
      %348 = vmatpush1.msra.mxu0 %v323
      %349 = vmatprep.subr.mxu0 0.0
      %350 = vmatpush1.msra.mxu0 %v324
      %351 = vmatprep.subr.mxu0 0.0
      %352 = vmatpush1.msra.mxu0 %v325
      %353 = vmatprep.subr.mxu0 0.0
      %354 = vmatpush1.msra.mxu0 %v326
      %355 = vmatprep.subr.mxu0 0.0
      %356 = vmatpush1.msra.mxu0 %v327
      %357 = vmatprep.subr.mxu0 0.0
      %358 = vmatpush1.msra.mxu0 %v328
      %359 = vmatprep.subr.mxu0 0.0
      %360 = vmatpush1.msra.mxu0 %v329
      %361 = vmatprep.subr.mxu0 0.0
      %362 = vmatpush1.msra.mxu0 %v330
      %363 = vmatprep.subr.mxu0 0.0
      %364 = vmatpush1.msra.mxu0 0.0
      %365 = vmatprep.subr.mxu0 0.0
      %366 = vmatpush1.msra.mxu0 0.0
      %367 = vmatprep.subr.mxu0 0.0
      %368 = vmatpush1.msra.mxu0 0.0
      %369 = vmatprep.subr.mxu0 0.0
      %370 = vmatpush1.msra.mxu0 0.0
      %371 = vmatprep.subr.mxu0 0.0
      %372 = vmatpush1.msra.mxu0 0.0
      %373 = vmatprep.subr.mxu0 0.0
      %374 = vmatpush1.msra.mxu0 0.0
      %375 = vmatprep.subr.mxu0 0.0
      %376 = vmatpush1.msra.mxu0 0.0
      %377 = vmatprep.subr.mxu0 0.0
      %378 = vmatpush1.msra.mxu0 0.0
      %379 = vmatprep.subr.mxu0 0.0
      %380 = vmatpush1.msra.mxu0 0.0
      %381 = vmatprep.subr.mxu0 0.0
      %382 = vmatpush1.msra.mxu0 0.0
      %383 = vmatprep.subr.mxu0 0.0
      %384 = vmatpush1.msra.mxu0 0.0
      %385 = vmatprep.subr.mxu0 0.0
      %386 = vmatpush1.msra.mxu0 0.0
      %387 = vmatprep.subr.mxu0 0.0
      %388 = vmatpush1.msra.mxu0 0.0
      %389 = vmatprep.subr.mxu0 0.0
      %390 = vmatpush1.msra.mxu0 0.0
      %391 = vmatprep.subr.mxu0 0.0
      %392 = vmatpush1.msra.mxu0 0.0
      %393 = vmatprep.subr.mxu0 0.0
      %394 = vmatpush1.msra.mxu0 0.0
      %395 = vmatprep.mubr.f32.mxu0 0.0
      %396 = vmatmul.mubr.f32.gmra.mrb[0].mxu0 %v313
      %v397 = vpop.f32.mrb[0].mxu0
      %v398 = vadd.f32 0.0, %v397
      %v399 = vpop.f32.mrb[0].mxu0
      %400 = vmatprep.mubr.f32.mxu0 0.0
      %401 = vmatmul.mubr.f32.gmra.mrb[0].mxu0 %v314
      %v402 = vpop.f32.mrb[0].mxu0
      %v403 = vadd.f32 0.0, %v402
      %v404 = vpop.f32.mrb[0].mxu0
      %405 = vdwg.mxu0
      %s406 = scalar_lea.vmem %s1, %s312
      %v407 = vld [vmem:[%s406] sm:$0xff]
      %v408 = vld [vmem:[%s3] sm:$0xff]
      %v409 = vld [vmem:[%s3 + $0x8] sm:$0xff]
      %v410 = vld [vmem:[%s3 + $0x10] sm:$0xff]
      %v411 = vld [vmem:[%s3 + $0x18] sm:$0xff]
      %v412 = vld [vmem:[%s3 + $0x20] sm:$0xff]
      %v413 = vld [vmem:[%s3 + $0x28] sm:$0xff]
      %v414 = vld [vmem:[%s3 + $0x30] sm:$0xff]
      %v415 = vld [vmem:[%s3 + $0x38] sm:$0xff]
      %v416 = vld [vmem:[%s3 + $0x40] sm:$0xff]
      %v417 = vld [vmem:[%s3 + $0x48] sm:$0xff]
      %v418 = vld [vmem:[%s3 + $0x50] sm:$0xff]
      %v419 = vld [vmem:[%s3 + $0x58] sm:$0xff]
      %v420 = vld [vmem:[%s3 + $0x60] sm:$0xff]
      %v421 = vld [vmem:[%s3 + $0x68] sm:$0xff]
      %v422 = vld [vmem:[%s3 + $0x70] sm:$0xff]
      %v423 = vld [vmem:[%s3 + $0x78] sm:$0xff]
      %424 = vmatprep.subr.mxu0 0.0
      %425 = vmatpush1.msra.mxu0 %v408
      %426 = vmatprep.subr.mxu0 0.0
      %427 = vmatpush1.msra.mxu0 %v409
      %428 = vmatprep.subr.mxu0 0.0
      %429 = vmatpush1.msra.mxu0 %v410
      %430 = vmatprep.subr.mxu0 0.0
      %431 = vmatpush1.msra.mxu0 %v411
      %432 = vmatprep.subr.mxu0 0.0
      %433 = vmatpush1.msra.mxu0 %v412
      %434 = vmatprep.subr.mxu0 0.0
      %435 = vmatpush1.msra.mxu0 %v413
      %436 = vmatprep.subr.mxu0 0.0
      %437 = vmatpush1.msra.mxu0 %v414
      %438 = vmatprep.subr.mxu0 0.0
      %439 = vmatpush1.msra.mxu0 %v415
      %440 = vmatprep.subr.mxu0 0.0
      %441 = vmatpush1.msra.mxu0 %v416
      %442 = vmatprep.subr.mxu0 0.0
      %443 = vmatpush1.msra.mxu0 %v417
      %444 = vmatprep.subr.mxu0 0.0
      %445 = vmatpush1.msra.mxu0 %v418
      %446 = vmatprep.subr.mxu0 0.0
      %447 = vmatpush1.msra.mxu0 %v419
      %448 = vmatprep.subr.mxu0 0.0
      %449 = vmatpush1.msra.mxu0 %v420
      %450 = vmatprep.subr.mxu0 0.0
      %451 = vmatpush1.msra.mxu0 %v421
      %452 = vmatprep.subr.mxu0 0.0
      %453 = vmatpush1.msra.mxu0 %v422
      %454 = vmatprep.subr.mxu0 0.0
      %455 = vmatpush1.msra.mxu0 %v423
      %456 = vmatprep.subr.mxu0 0.0
      %457 = vmatpush1.msra.mxu0 0.0
      %458 = vmatprep.subr.mxu0 0.0
      %459 = vmatpush1.msra.mxu0 0.0
      %460 = vmatprep.subr.mxu0 0.0
      %461 = vmatpush1.msra.mxu0 0.0
      %462 = vmatprep.subr.mxu0 0.0
      %463 = vmatpush1.msra.mxu0 0.0
      %464 = vmatprep.subr.mxu0 0.0
      %465 = vmatpush1.msra.mxu0 0.0
      %466 = vmatprep.subr.mxu0 0.0
      %467 = vmatpush1.msra.mxu0 0.0
      %468 = vmatprep.subr.mxu0 0.0
      %469 = vmatpush1.msra.mxu0 0.0
      %470 = vmatprep.subr.mxu0 0.0
      %471 = vmatpush1.msra.mxu0 0.0
      %472 = vmatprep.subr.mxu0 0.0
      %473 = vmatpush1.msra.mxu0 0.0
      %474 = vmatprep.subr.mxu0 0.0
      %475 = vmatpush1.msra.mxu0 0.0
      %476 = vmatprep.subr.mxu0 0.0
      %477 = vmatpush1.msra.mxu0 0.0
      %478 = vmatprep.subr.mxu0 0.0
      %479 = vmatpush1.msra.mxu0 0.0
      %480 = vmatprep.subr.mxu0 0.0
      %481 = vmatpush1.msra.mxu0 0.0
      %482 = vmatprep.subr.mxu0 0.0
      %483 = vmatpush1.msra.mxu0 0.0
      %484 = vmatprep.subr.mxu0 0.0
      %485 = vmatpush1.msra.mxu0 0.0
      %486 = vmatprep.subr.mxu0 0.0
      %487 = vmatpush1.msra.mxu0 0.0
      %488 = vmatprep.mubr.f32.mxu0 0.0
      %489 = vmatmul.mubr.f32.gmra.mrb[0].mxu0 %v407
      %v490 = vpop.f32.mrb[0].mxu0
      %v491 = vadd.f32 0.0, %v490
      %v492 = vpop.f32.mrb[0].mxu0
      %493 = vdwg.mxu0
      %v495 = vcombine.high %v491, %v491
      %v497 = vunpack.c.l.s4 1966171168
      %v498 = vunpack.c.0.s8 %v497
      %v499 = vlaneseq
      %v500 = vshrl.u32 %v499, 7
      %v501 = vsub.s32 %v498, %v500
      %v502 = vrot.slane %v491, %v501
      %v504 = vunpack.c.l.s4 1966171168
      %v505 = vunpack.c.0.s8 %v504
      %v506 = vlaneseq
      %v507 = vshrl.u32 %v506, 7
      %v508 = vsub.s32 %v505, %v507
      %v509 = vrot.slane %v495, %v508
      %v510 = vcombine.high %v502, %v502
      %v511 = vcombine.high %v509, %v509
      %v513 = vunpack.c.l.s4 1966171168
      %v514 = vunpack.c.0.s8 %v513
      %v515 = vlaneseq
      %v516 = vshrl.u32 %v515, 7
      %v517 = vsub.s32 %v514, %v516
      %v518 = vrot.slane %v502, %v517
      %v520 = vunpack.c.l.s4 1966171168
      %v521 = vunpack.c.0.s8 %v520
      %v522 = vlaneseq
      %v523 = vshrl.u32 %v522, 7
      %v524 = vsub.s32 %v521, %v523
      %v525 = vrot.slane %v509, %v524
      %v527 = vunpack.c.l.s4 1966171168
      %v528 = vunpack.c.0.s8 %v527
      %v529 = vlaneseq
      %v530 = vshrl.u32 %v529, 7
      %v531 = vsub.s32 %v528, %v530
      %v532 = vrot.slane %v510, %v531
      %v534 = vunpack.c.l.s4 1966171168
      %v535 = vunpack.c.0.s8 %v534
      %v536 = vlaneseq
      %v537 = vshrl.u32 %v536, 7
      %v538 = vsub.s32 %v535, %v537
      %v539 = vrot.slane %v511, %v538
      %v540 = vcombine.high %v518, %v518
      %v541 = vcombine.high %v525, %v525
      %v542 = vcombine.high %v532, %v532
      %v543 = vcombine.high %v539, %v539
      %v544 = vlaneseq
      %v545 = vshrl.u32 %v544, 7
      %v546 = vsub.s32 0, %v545
      %v547 = vrot.slane %v518, %v546
      %v548 = vlaneseq
      %v549 = vshrl.u32 %v548, 7
      %v550 = vsub.s32 0, %v549
      %v551 = vrot.slane %v532, %v550
      %v552 = vlaneseq
      %v553 = vshrl.u32 %v552, 7
      %v554 = vsub.s32 0, %v553
      %v555 = vrot.slane %v540, %v554
      %v556 = vlaneseq
      %v557 = vshrl.u32 %v556, 7
      %v558 = vsub.s32 0, %v557
      %v559 = vrot.slane %v542, %v558
      %v560 = vlaneseq
      %v561 = vshrl.u32 %v560, 7
      %v562 = vsub.s32 0, %v561
      %v563 = vrot.slane %v525, %v562
      %v564 = vlaneseq
      %v565 = vshrl.u32 %v564, 7
      %v566 = vsub.s32 0, %v565
      %v567 = vrot.slane %v539, %v566
      %v568 = vlaneseq
      %v569 = vshrl.u32 %v568, 7
      %v570 = vsub.s32 0, %v569
      %v571 = vrot.slane %v541, %v570
      %v572 = vlaneseq
      %v573 = vshrl.u32 %v572, 7
      %v574 = vsub.s32 0, %v573
      %v575 = vrot.slane %v543, %v574
      %v584 = vadd.f32 %v547, %v398
      %v585 = vadd.f32 %v547, %v403
      %v586 = vadd.f32 %v551, %v398
      %v587 = vadd.f32 %v551, %v403
      %v588 = vadd.f32 %v555, %v398
      %v589 = vadd.f32 %v555, %v403
      %v590 = vadd.f32 %v559, %v398
      %v591 = vadd.f32 %v559, %v403
      %v592 = vadd.f32 %v563, %v398
      %v593 = vadd.f32 %v563, %v403
      %v594 = vadd.f32 %v567, %v398
      %v595 = vadd.f32 %v567, %v403
      %v596 = vadd.f32 %v571, %v398
      %v597 = vadd.f32 %v571, %v403
      %v598 = vadd.f32 %v575, %v398
      %v599 = vadd.f32 %v575, %v403
      %vm600 = vcmp.gt.f32.partialorder %v584, 0.0
      %vm601 = vcmp.gt.f32.partialorder %v585, 0.0
      %vm602 = vcmp.gt.f32.partialorder %v586, 0.0
      %vm603 = vcmp.gt.f32.partialorder %v587, 0.0
      %vm604 = vcmp.gt.f32.partialorder %v588, 0.0
      %vm605 = vcmp.gt.f32.partialorder %v589, 0.0
      %vm606 = vcmp.gt.f32.partialorder %v590, 0.0
      %vm607 = vcmp.gt.f32.partialorder %v591, 0.0
      %vm608 = vcmp.gt.f32.partialorder %v592, 0.0
      %vm609 = vcmp.gt.f32.partialorder %v593, 0.0
      %vm610 = vcmp.gt.f32.partialorder %v594, 0.0
      %vm611 = vcmp.gt.f32.partialorder %v595, 0.0
      %vm612 = vcmp.gt.f32.partialorder %v596, 0.0
      %vm613 = vcmp.gt.f32.partialorder %v597, 0.0
      %vm614 = vcmp.gt.f32.partialorder %v598, 0.0
      %vm615 = vcmp.gt.f32.partialorder %v599, 0.0
      %v616 = vmul.f32 %v584, 0.2
      %v617 = vmul.f32 %v585, 0.2
      %v618 = vmul.f32 %v586, 0.2
      %v619 = vmul.f32 %v587, 0.2
      %v620 = vmul.f32 %v588, 0.2
      %v621 = vmul.f32 %v589, 0.2
      %v622 = vmul.f32 %v590, 0.2
      %v623 = vmul.f32 %v591, 0.2
      %v624 = vmul.f32 %v592, 0.2
      %v625 = vmul.f32 %v593, 0.2
      %v626 = vmul.f32 %v594, 0.2
      %v627 = vmul.f32 %v595, 0.2
      %v628 = vmul.f32 %v596, 0.2
      %v629 = vmul.f32 %v597, 0.2
      %v630 = vmul.f32 %v598, 0.2
      %v631 = vmul.f32 %v599, 0.2
      %v632 = vsel %vm600, %v584, %v616
      %v633 = vsel %vm601, %v585, %v617
      %v634 = vsel %vm602, %v586, %v618
      %v635 = vsel %vm603, %v587, %v619
      %v636 = vsel %vm604, %v588, %v620
      %v637 = vsel %vm605, %v589, %v621
      %v638 = vsel %vm606, %v590, %v622
      %v639 = vsel %vm607, %v591, %v623
      %v640 = vsel %vm608, %v592, %v624
      %v641 = vsel %vm609, %v593, %v625
      %v642 = vsel %vm610, %v594, %v626
      %v643 = vsel %vm611, %v595, %v627
      %v644 = vsel %vm612, %v596, %v628
      %v645 = vsel %vm613, %v597, %v629
      %v646 = vsel %vm614, %v598, %v630
      %v647 = vsel %vm615, %v599, %v631
      %v648 = vld [vmem:[%s4] sm:$0x1]
      %v650 = vlaneseq
      %v651 = vshrl.u32 %v650, 7
      %v652 = vsub.s32 0, %v651
      %v653 = vrot.slane %v648, %v652
      %v655 = vmul.f32 %v632, %v653
      %v656 = vmul.f32 %v633, %v653
      %v657 = vmul.f32 %v634, %v653
      %v658 = vmul.f32 %v635, %v653
      %v659 = vmul.f32 %v636, %v653
      %v660 = vmul.f32 %v637, %v653
      %v661 = vmul.f32 %v638, %v653
      %v662 = vmul.f32 %v639, %v653
      %v663 = vmul.f32 %v640, %v653
      %v664 = vmul.f32 %v641, %v653
      %v665 = vmul.f32 %v642, %v653
      %v666 = vmul.f32 %v643, %v653
      %v667 = vmul.f32 %v644, %v653
      %v668 = vmul.f32 %v645, %v653
      %v669 = vmul.f32 %v646, %v653
      %v670 = vmul.f32 %v647, %v653
      %671 = vadd.xlane.f32.xlu0 %v655
      %v672 = vpop.xlane.xlu0 %671
      %673 = vadd.xlane.f32.xlu0 %v656
      %v674 = vpop.xlane.xlu0 %673
      %675 = vadd.xlane.f32.xlu0 %v657
      %v676 = vpop.xlane.xlu0 %675
      %677 = vadd.xlane.f32.xlu0 %v658
      %v678 = vpop.xlane.xlu0 %677
      %679 = vadd.xlane.f32.xlu0 %v659
      %v680 = vpop.xlane.xlu0 %679
      %681 = vadd.xlane.f32.xlu0 %v660
      %v682 = vpop.xlane.xlu0 %681
      %683 = vadd.xlane.f32.xlu0 %v661
      %v684 = vpop.xlane.xlu0 %683
      %685 = vadd.xlane.f32.xlu0 %v662
      %v686 = vpop.xlane.xlu0 %685
      %687 = vadd.xlane.f32.xlu0 %v663
      %v688 = vpop.xlane.xlu0 %687
      %689 = vadd.xlane.f32.xlu0 %v664
      %v690 = vpop.xlane.xlu0 %689
      %691 = vadd.xlane.f32.xlu0 %v665
      %v692 = vpop.xlane.xlu0 %691
      %693 = vadd.xlane.f32.xlu0 %v666
      %v694 = vpop.xlane.xlu0 %693
      %695 = vadd.xlane.f32.xlu0 %v667
      %v696 = vpop.xlane.xlu0 %695
      %697 = vadd.xlane.f32.xlu0 %v668
      %v698 = vpop.xlane.xlu0 %697
      %699 = vadd.xlane.f32.xlu0 %v669
      %v700 = vpop.xlane.xlu0 %699
      %701 = vadd.xlane.f32.xlu0 %v670
      %v702 = vpop.xlane.xlu0 %701
      %v703 = vlaneseq
      %v704 = vshrl.u32 %v703, 7
      %v705 = vstv %s312
      %v706 = vadd.s32 %v704, %v705
      %v707 = vlaneseq
      %v708 = vand.u32 %v707, 127
      %v709 = vld [vmem:[%s303] sm:$0xff]
      %vm710 = vcmp.eq.s32.totalorder %v706, %v708
      %v711 = vsel %vm710, 1, 0
      %v712 = vcvt.s32.f32 %v711
      %v713 = vmax.f32 %v709, %v712
      %vm714 = vcmp.gt.f32.partialorder %v713, 0.0
      %v731 = vlaneseq
      %v732 = vshrl.u32 %v731, 7
      %v733 = vsub.s32 %v708, %v732
      %v734 = vrot.slane %v672, %v733
      %v735 = vadd.s32 %v708, 4294967288
      %v736 = vlaneseq
      %v737 = vshrl.u32 %v736, 7
      %v738 = vsub.s32 %v735, %v737
      %v739 = vrot.slane %v674, %v738
      %vm740 = vcmask 130112
      %v741 = vsel %vm740, %v739, %v734
      %v742 = vlaneseq
      %v743 = vshrl.u32 %v742, 7
      %v744 = vsub.s32 %v708, %v743
      %v745 = vrot.slane %v676, %v744
      %v746 = vlaneseq
      %v747 = vshrl.u32 %v746, 7
      %v748 = vsub.s32 %v735, %v747
      %v749 = vrot.slane %v678, %v748
      %v750 = vsel %vm740, %v749, %v745
      %v751 = vlaneseq
      %v752 = vshrl.u32 %v751, 7
      %v753 = vsub.s32 %v708, %v752
      %v754 = vrot.slane %v680, %v753
      %v755 = vlaneseq
      %v756 = vshrl.u32 %v755, 7
      %v757 = vsub.s32 %v735, %v756
      %v758 = vrot.slane %v682, %v757
      %v759 = vsel %vm740, %v758, %v754
      %v760 = vlaneseq
      %v761 = vshrl.u32 %v760, 7
      %v762 = vsub.s32 %v708, %v761
      %v763 = vrot.slane %v684, %v762
      %v764 = vlaneseq
      %v765 = vshrl.u32 %v764, 7
      %v766 = vsub.s32 %v735, %v765
      %v767 = vrot.slane %v686, %v766
      %v768 = vsel %vm740, %v767, %v763
      %v769 = vlaneseq
      %v770 = vshrl.u32 %v769, 7
      %v771 = vsub.s32 %v708, %v770
      %v772 = vrot.slane %v688, %v771
      %v773 = vlaneseq
      %v774 = vshrl.u32 %v773, 7
      %v775 = vsub.s32 %v735, %v774
      %v776 = vrot.slane %v690, %v775
      %v777 = vsel %vm740, %v776, %v772
      %v778 = vlaneseq
      %v779 = vshrl.u32 %v778, 7
      %v780 = vsub.s32 %v708, %v779
      %v781 = vrot.slane %v692, %v780
      %v782 = vlaneseq
      %v783 = vshrl.u32 %v782, 7
      %v784 = vsub.s32 %v735, %v783
      %v785 = vrot.slane %v694, %v784
      %v786 = vsel %vm740, %v785, %v781
      %v787 = vlaneseq
      %v788 = vshrl.u32 %v787, 7
      %v789 = vsub.s32 %v708, %v788
      %v790 = vrot.slane %v696, %v789
      %v791 = vlaneseq
      %v792 = vshrl.u32 %v791, 7
      %v793 = vsub.s32 %v735, %v792
      %v794 = vrot.slane %v698, %v793
      %v795 = vsel %vm740, %v794, %v790
      %v796 = vlaneseq
      %v797 = vshrl.u32 %v796, 7
      %v798 = vsub.s32 %v708, %v797
      %v799 = vrot.slane %v700, %v798
      %v800 = vlaneseq
      %v801 = vshrl.u32 %v800, 7
      %v802 = vsub.s32 %v735, %v801
      %v803 = vrot.slane %v702, %v802
      %v804 = vsel %vm740, %v803, %v799
      %vm805 = vcmask 1041409
      %v806 = vsel %vm805, %v750, %v741
      %vm807 = vcmask 1042434
      %v808 = vsel %vm807, %v759, %v806
      %vm809 = vcmask 1043459
      %v810 = vsel %vm809, %v768, %v808
      %vm811 = vcmask 1044484
      %v812 = vsel %vm811, %v777, %v810
      %vm813 = vcmask 1045509
      %v814 = vsel %vm813, %v786, %v812
      %vm815 = vcmask 1046534
      %v816 = vsel %vm815, %v795, %v814
      %vm817 = vcmask 1047559
      %v818 = vsel %vm817, %v804, %v816
      %v820 = vsel %vm714, %v818, -1e+30
      %vm821 = vcmask 130048
      %v822 = vsel %vm821, %v820, -inf
      %823 = vmax.xlane.f32.xlu0 %v822
      %v824 = vpop.xlane.xlu0 %823
      %v825 = vsub.f32 %v820, %v824
      %v826 = vmul.f32 %v825, 1.442695
      %v827 = vpow.pop %v826
      %v828 = vmul.f32 %v827, %v713
      %v829 = vsel %vm821, %v828, 0.0
      %830 = vadd.xlane.f32.xlu0 %v829
      %v831 = vpop.xlane.xlu0 %830
      %v832 = vrcp.pop %v831
      %v833 = vmul.f32 %v828, %v832
      %v834 = vld [vmem:[%s5] sm:$0x1]
      %v836 = vlaneseq
      %v837 = vshrl.u32 %v836, 7
      %v838 = vsub.s32 0, %v837
      %v839 = vrot.slane %v834, %v838
      %v842 = vsel %vm821, %v833, 0
      %844 = vmatprep.subr.mxu0 0.0
      %845 = vmatpush1.msra.mxu0 %v398
      %846 = vmatprep.subr.mxu0 0.0
      %847 = vmatpush1.msra.mxu0 %v403
      %848 = vmatprep.subr.mxu0 0.0
      %849 = vmatpush1.msra.mxu0 0.0
      %850 = vmatprep.subr.mxu0 0.0
      %851 = vmatpush1.msra.mxu0 0.0
      %852 = vmatprep.subr.mxu0 0.0
      %853 = vmatpush1.msra.mxu0 0.0
      %854 = vmatprep.subr.mxu0 0.0
      %855 = vmatpush1.msra.mxu0 0.0
      %856 = vmatprep.subr.mxu0 0.0
      %857 = vmatpush1.msra.mxu0 0.0
      %858 = vmatprep.subr.mxu0 0.0
      %859 = vmatpush1.msra.mxu0 0.0
      %860 = vmatprep.subr.mxu0 0.0
      %861 = vmatpush1.msra.mxu0 0.0
      %862 = vmatprep.subr.mxu0 0.0
      %863 = vmatpush1.msra.mxu0 0.0
      %864 = vmatprep.subr.mxu0 0.0
      %865 = vmatpush1.msra.mxu0 0.0
      %866 = vmatprep.subr.mxu0 0.0
      %867 = vmatpush1.msra.mxu0 0.0
      %868 = vmatprep.subr.mxu0 0.0
      %869 = vmatpush1.msra.mxu0 0.0
      %870 = vmatprep.subr.mxu0 0.0
      %871 = vmatpush1.msra.mxu0 0.0
      %872 = vmatprep.subr.mxu0 0.0
      %873 = vmatpush1.msra.mxu0 0.0
      %874 = vmatprep.subr.mxu0 0.0
      %875 = vmatpush1.msra.mxu0 0.0
      %876 = vmatprep.subr.mxu0 0.0
      %877 = vmatpush1.msra.mxu0 0.0
      %878 = vmatprep.subr.mxu0 0.0
      %879 = vmatpush1.msra.mxu0 0.0
      %880 = vmatprep.subr.mxu0 0.0
      %881 = vmatpush1.msra.mxu0 0.0
      %882 = vmatprep.subr.mxu0 0.0
      %883 = vmatpush1.msra.mxu0 0.0
      %884 = vmatprep.subr.mxu0 0.0
      %885 = vmatpush1.msra.mxu0 0.0
      %886 = vmatprep.subr.mxu0 0.0
      %887 = vmatpush1.msra.mxu0 0.0
      %888 = vmatprep.subr.mxu0 0.0
      %889 = vmatpush1.msra.mxu0 0.0
      %890 = vmatprep.subr.mxu0 0.0
      %891 = vmatpush1.msra.mxu0 0.0
      %892 = vmatprep.subr.mxu0 0.0
      %893 = vmatpush1.msra.mxu0 0.0
      %894 = vmatprep.subr.mxu0 0.0
      %895 = vmatpush1.msra.mxu0 0.0
      %896 = vmatprep.subr.mxu0 0.0
      %897 = vmatpush1.msra.mxu0 0.0
      %898 = vmatprep.subr.mxu0 0.0
      %899 = vmatpush1.msra.mxu0 0.0
      %900 = vmatprep.subr.mxu0 0.0
      %901 = vmatpush1.msra.mxu0 0.0
      %902 = vmatprep.subr.mxu0 0.0
      %903 = vmatpush1.msra.mxu0 0.0
      %904 = vmatprep.subr.mxu0 0.0
      %905 = vmatpush1.msra.mxu0 0.0
      %906 = vmatprep.subr.mxu0 0.0
      %907 = vmatpush1.msra.mxu0 0.0
      %908 = vmatprep.mubr.f32.mxu0 0.0
      %909 = vmatmul.mubr.f32.gmra.mrb[0].mxu0 %v842
      %v910 = vpop.f32.mrb[0].mxu0
      %v911 = vadd.f32 %v839, %v910
      %v912 = vpop.f32.mrb[0].mxu0
      %913 = vdwg.mxu0
      %vm914 = vcmp.gt.f32.partialorder %v911, 0.0
      %v915 = vmul.f32 %v911, 0.01
      %v916 = vsel %vm914, %v911, %v915
      %v917 = vld [vmem:[%s6] sm:$0xff]
      %v918 = vld [vmem:[%s6 + $0x8] sm:$0xff]
      %v919 = vld [vmem:[%s6 + $0x10] sm:$0xff]
      %v920 = vld [vmem:[%s6 + $0x18] sm:$0xff]
      %v921 = vld [vmem:[%s6 + $0x20] sm:$0xff]
      %v922 = vld [vmem:[%s6 + $0x28] sm:$0xff]
      %v923 = vld [vmem:[%s6 + $0x30] sm:$0xff]
      %v924 = vld [vmem:[%s6 + $0x38] sm:$0xff]
      %v925 = vld [vmem:[%s6 + $0x40] sm:$0xff]
      %v926 = vld [vmem:[%s6 + $0x48] sm:$0xff]
      %v927 = vld [vmem:[%s6 + $0x50] sm:$0xff]
      %v928 = vld [vmem:[%s6 + $0x58] sm:$0xff]
      %v929 = vld [vmem:[%s6 + $0x60] sm:$0xff]
      %v930 = vld [vmem:[%s6 + $0x68] sm:$0xff]
      %v931 = vld [vmem:[%s6 + $0x70] sm:$0xff]
      %v932 = vld [vmem:[%s6 + $0x78] sm:$0xff]
      %v933 = vmul.f32 %v917, %v917
      %v934 = vmul.f32 %v918, %v918
      %v935 = vmul.f32 %v919, %v919
      %v936 = vmul.f32 %v920, %v920
      %v937 = vmul.f32 %v921, %v921
      %v938 = vmul.f32 %v922, %v922
      %v939 = vmul.f32 %v923, %v923
      %v940 = vmul.f32 %v924, %v924
      %v941 = vmul.f32 %v925, %v925
      %v942 = vmul.f32 %v926, %v926
      %v943 = vmul.f32 %v927, %v927
      %v944 = vmul.f32 %v928, %v928
      %v945 = vmul.f32 %v929, %v929
      %v946 = vmul.f32 %v930, %v930
      %v947 = vmul.f32 %v931, %v931
      %v948 = vmul.f32 %v932, %v932
      %vm949 = vcmask 7168
      %v950 = vsel %vm949, %v933, 0.0
      %v951 = vsel %vm949, %v934, 0.0
      %v952 = vadd.f32 %v950, %v951
      %v953 = vsel %vm949, %v935, 0.0
      %v954 = vadd.f32 %v952, %v953
      %v955 = vsel %vm949, %v936, 0.0
      %v956 = vadd.f32 %v954, %v955
      %v957 = vsel %vm949, %v937, 0.0
      %v958 = vadd.f32 %v956, %v957
      %v959 = vsel %vm949, %v938, 0.0
      %v960 = vadd.f32 %v958, %v959
      %v961 = vsel %vm949, %v939, 0.0
      %v962 = vadd.f32 %v960, %v961
      %v963 = vsel %vm949, %v940, 0.0
      %v964 = vadd.f32 %v962, %v963
      %v965 = vsel %vm949, %v941, 0.0
      %v966 = vadd.f32 %v964, %v965
      %v967 = vsel %vm949, %v942, 0.0
      %v968 = vadd.f32 %v966, %v967
      %v969 = vsel %vm949, %v943, 0.0
      %v970 = vadd.f32 %v968, %v969
      %v971 = vsel %vm949, %v944, 0.0
      %v972 = vadd.f32 %v970, %v971
      %v973 = vsel %vm949, %v945, 0.0
      %v974 = vadd.f32 %v972, %v973
      %v975 = vsel %vm949, %v946, 0.0
      %v976 = vadd.f32 %v974, %v975
      %v977 = vsel %vm949, %v947, 0.0
      %v978 = vadd.f32 %v976, %v977
      %v979 = vsel %vm949, %v948, 0.0
      %v980 = vadd.f32 %v978, %v979
      %981 = vadd.xlane.f32.xlu0 %v980
      %v982 = vpop.xlane.xlu0 %981
      %v983 = vrot.slane %v982, 4
      %v984 = vadd.f32 %v982, %v983
      %v985 = vrot.slane %v984, 2
      %v986 = vadd.f32 %v984, %v985
      %v987 = vrot.slane %v986, 1
      %v988 = vadd.f32 %v986, %v987
      %s989 = vtos %v988
      %v990 = vstv %s989
      %v991 = vrsqrt.pop %v990
      %992 = vmatprep.subr.mxu0 0.0
      %993 = vmatpush1.msra.mxu0 %v917
      %994 = vmatprep.subr.mxu0 0.0
      %995 = vmatpush1.msra.mxu0 %v918
      %996 = vmatprep.subr.mxu0 0.0
      %997 = vmatpush1.msra.mxu0 %v919
      %998 = vmatprep.subr.mxu0 0.0
      %999 = vmatpush1.msra.mxu0 %v920
      %1000 = vmatprep.subr.mxu0 0.0
      %1001 = vmatpush1.msra.mxu0 %v921
      %1002 = vmatprep.subr.mxu0 0.0
      %1003 = vmatpush1.msra.mxu0 %v922
      %1004 = vmatprep.subr.mxu0 0.0
      %1005 = vmatpush1.msra.mxu0 %v923
      %1006 = vmatprep.subr.mxu0 0.0
      %1007 = vmatpush1.msra.mxu0 %v924
      %1008 = vmatprep.subr.mxu0 0.0
      %1009 = vmatpush1.msra.mxu0 %v925
      %1010 = vmatprep.subr.mxu0 0.0
      %1011 = vmatpush1.msra.mxu0 %v926
      %1012 = vmatprep.subr.mxu0 0.0
      %1013 = vmatpush1.msra.mxu0 %v927
      %1014 = vmatprep.subr.mxu0 0.0
      %1015 = vmatpush1.msra.mxu0 %v928
      %1016 = vmatprep.subr.mxu0 0.0
      %1017 = vmatpush1.msra.mxu0 %v929
      %1018 = vmatprep.subr.mxu0 0.0
      %1019 = vmatpush1.msra.mxu0 %v930
      %1020 = vmatprep.subr.mxu0 0.0
      %1021 = vmatpush1.msra.mxu0 %v931
      %1022 = vmatprep.subr.mxu0 0.0
      %1023 = vmatpush1.msra.mxu0 %v932
      %1024 = vmatprep.subr.mxu0 0.0
      %1025 = vmatpush1.msra.mxu0 0.0
      %1026 = vmatprep.subr.mxu0 0.0
      %1027 = vmatpush1.msra.mxu0 0.0
      %1028 = vmatprep.subr.mxu0 0.0
      %1029 = vmatpush1.msra.mxu0 0.0
      %1030 = vmatprep.subr.mxu0 0.0
      %1031 = vmatpush1.msra.mxu0 0.0
      %1032 = vmatprep.subr.mxu0 0.0
      %1033 = vmatpush1.msra.mxu0 0.0
      %1034 = vmatprep.subr.mxu0 0.0
      %1035 = vmatpush1.msra.mxu0 0.0
      %1036 = vmatprep.subr.mxu0 0.0
      %1037 = vmatpush1.msra.mxu0 0.0
      %1038 = vmatprep.subr.mxu0 0.0
      %1039 = vmatpush1.msra.mxu0 0.0
      %1040 = vmatprep.subr.mxu0 0.0
      %1041 = vmatpush1.msra.mxu0 0.0
      %1042 = vmatprep.subr.mxu0 0.0
      %1043 = vmatpush1.msra.mxu0 0.0
      %1044 = vmatprep.subr.mxu0 0.0
      %1045 = vmatpush1.msra.mxu0 0.0
      %1046 = vmatprep.subr.mxu0 0.0
      %1047 = vmatpush1.msra.mxu0 0.0
      %1048 = vmatprep.subr.mxu0 0.0
      %1049 = vmatpush1.msra.mxu0 0.0
      %1050 = vmatprep.subr.mxu0 0.0
      %1051 = vmatpush1.msra.mxu0 0.0
      %1052 = vmatprep.subr.mxu0 0.0
      %1053 = vmatpush1.msra.mxu0 0.0
      %1054 = vmatprep.subr.mxu0 0.0
      %1055 = vmatpush1.msra.mxu0 0.0
      %1056 = vmatprep.mubr.f32.mxu0 0.0
      %1057 = vmatmul.mubr.f32.gmra.mrb[0].mxu0 %v916
      %v1058 = vpop.f32.mrb[0].mxu0
      %v1059 = vadd.f32 0.0, %v1058
      %v1060 = vpop.f32.mrb[0].mxu0
      %1061 = vdwg.mxu0
      %v1062 = vmul.f32 %v1059, %v991
      %v1063 = vtanh.pop %v1062
      %1065 = vset.pattern.permute.xlu0 0
      %1066 = vperm.xlu0 %1065, %v1063
      %v1067 = vpop.permute.xlu0 %1066
      %v1069 = vmul.f32 %v916, %v1067
      %1070 = vst [vmem:[%s307] sm:$0xff] %v1069
      %1071 = vst.msk [vmem:[%s311] sm:$0xff] %vm949, %v1063
      %p1072 = scmp.lt.s32.totalorder %s20, 1
      %s1073 = scalar_select %p1072, %s20, 1
      %s1074 = smul.addr %s1073, 8
      %s1075 = scalar_lea.vmem %s7, %s1074
      %p1076 = scmp.lt.s32.totalorder %s20, 1
      %s1077 = scalar_select %p1076, %s20, 1
      %s1078 = smul.addr %s1077, 8
      %s1079 = scalar_lea.vmem %s8, %s1078
      // Predicated region
      $region49: #{agnn_efg_forward.4} parent=47 // pred_check
        %p1080 = pneg %p190
      $region50: #{agnn_efg_forward.4} parent=47 // pred_check_branch
        %1082 = sbr.rel (%p1080) target = $region52
      $region51: #{agnn_efg_forward.4} parent=47 // pred_region
        _
      $region52: #{agnn_efg_forward.4} parent=47 // pred_fallthru
        _
      // Predicated region
      $region53: #{agnn_efg_forward.4} parent=47 // pred_check
        %p1083 = pneg %p216
      $region54: #{agnn_efg_forward.4} parent=47 // pred_check_branch
        %1085 = sbr.rel (%p1083) target = $region56
      $region55: #{agnn_efg_forward.4} parent=47 // pred_region
        _
      $region56: #{agnn_efg_forward.4} parent=47 // pred_fallthru
        _
    $region48: #{agnn_efg_forward.4} parent=5 // pred_fallthru
      _
    %p1086 = scmp.le.s32.totalorder 2, %s15
    // Predicated region
    $region57: #{agnn_efg_forward.4} parent=5 // pred_check
      %p1087 = pneg %p1086
    $region58: #{agnn_efg_forward.4} parent=5 // pred_check_branch
      %1089 = sbr.rel (%p1087) target = $region60
    $region59: #{agnn_efg_forward.4} parent=5 // pred_region
      %s1090 = ssub.s32 %s15, 2
      // Predicated region
      $region61: #{agnn_efg_forward.4} parent=59 // pred_check
        %p1091 = pneg %p196
      $region62: #{agnn_efg_forward.4} parent=59 // pred_check_branch
        %1093 = sbr.rel (%p1091) target = $region64
      $region63: #{agnn_efg_forward.4} parent=59 // pred_region
        %p1094 = scmp.lt.s32.totalorder %s21, 1
        %s1095 = scalar_select %p1094, %s21, 1
        %s1096 = smul.addr %s1095, 8
        %s1097 = scalar_lea.vmem %s7, %s1096
      $region64: #{agnn_efg_forward.4} parent=59 // pred_fallthru
        _
      // Predicated region
      $region65: #{agnn_efg_forward.4} parent=59 // pred_check
        %p1098 = pneg %p222
      $region66: #{agnn_efg_forward.4} parent=59 // pred_check_branch
        %1100 = sbr.rel (%p1098) target = $region68
      $region67: #{agnn_efg_forward.4} parent=59 // pred_region
        %p1101 = scmp.lt.s32.totalorder %s21, 1
        %s1102 = scalar_select %p1101, %s21, 1
        %s1103 = smul.addr %s1102, 8
        %s1104 = scalar_lea.vmem %s8, %s1103
      $region68: #{agnn_efg_forward.4} parent=59 // pred_fallthru
        _
    $region60: #{agnn_efg_forward.4} parent=5 // pred_fallthru
      _
  $region6: #{agnn_efg_forward.4} parent=0 // loop_footer
    %s19 = sadd.s32 1, %s15
  $region7: #{agnn_efg_forward.4} parent=0 // loop_footer_branch
    %14 = sbr.rel target = $region3
  $region8: #{agnn_efg_forward.4} parent=0 // loop_exit
    _

// kernel: agnn_efg_forward.5
$region0: #{agnn_efg_forward.5}
  #allocation0 [shape = 'u32[]', space=smem, size = 0x4, offset = 0x4, fixed_abs, tag = 'smem constant byte address 0x4 - core index']
  #allocation1 [shape = 'u32[144,128]{1,0:T(1,128)}', space=vmem, size = 0x12000, scoped, tag = 'internal scratch']
  %s0 = inlined_call_operand.vmem [shape: f32[2,4,128], index: 0, kind: input, shape index: {}]
  %s1 = inlined_call_operand.vmem [shape: f32[128,128], index: 1, kind: input, shape index: {}]
  %s2 = inlined_call_operand.vmem [shape: f32[1,128], index: 2, kind: input, shape index: {}]
  %s3 = inlined_call_operand.vmem [shape: f32[128,128], index: 3, kind: input, shape index: {}]
  %s4 = inlined_call_operand.vmem [shape: f32[1,128], index: 4, kind: input, shape index: {}]
  %s5 = inlined_call_operand.hbm [shape: f32[2,128], index: 5, kind: output, shape index: {}]
  %s6 = sld [smem:[#allocation0]]
  $region30: #{agnn_efg_forward.5} parent=0
    _
  %s8 = ssub.s32 1, %s6
  %s9 = scalar_select 0, %s8, %s6
  $region1: #{agnn_efg_forward.5} parent=0
    #allocation2 [shape = 'u8[1024]{0}', space=vmem, size = 0x400, scoped, tag = 'output window, operand 0, single buffered']
    #allocation3 [shape = 's32[1]{0}', space=sflag, size = 0x4, scoped, tag = 'scoped memory for agnn_efg_forward.5']
    %10 = vsyncpa [#allocation3], 0
    // Predicated region
    $region2: #{agnn_efg_forward.5} parent=1 // pred_check
      _
    $region3: #{agnn_efg_forward.5} parent=1 // pred_check_branch
      %12 = sbr.rel (0) target = $region5
    $region4: #{agnn_efg_forward.5} parent=1 // pred_region
      _
    $region5: #{agnn_efg_forward.5} parent=1 // pred_fallthru
      _
    // Predicated region
    $region6: #{agnn_efg_forward.5} parent=1 // pred_check
      _
    $region7: #{agnn_efg_forward.5} parent=1 // pred_check_branch
      %14 = sbr.rel (0) target = $region9
    $region8: #{agnn_efg_forward.5} parent=1 // pred_region
      _
    $region9: #{agnn_efg_forward.5} parent=1 // pred_fallthru
      _
    // Predicated region
    $region10: #{agnn_efg_forward.5} parent=1 // pred_check
      _
    $region11: #{agnn_efg_forward.5} parent=1 // pred_check_branch
      %16 = sbr.rel (0) target = $region13
    $region12: #{agnn_efg_forward.5} parent=1 // pred_region
      _
    $region13: #{agnn_efg_forward.5} parent=1 // pred_fallthru
      _
    // Predicated region
    $region14: #{agnn_efg_forward.5} parent=1 // pred_check
      _
    $region15: #{agnn_efg_forward.5} parent=1 // pred_check_branch
      %18 = sbr.rel (0) target = $region17
    $region16: #{agnn_efg_forward.5} parent=1 // pred_region
      _
    $region17: #{agnn_efg_forward.5} parent=1 // pred_fallthru
      _
    // Predicated region
    $region18: #{agnn_efg_forward.5} parent=1 // pred_check
      _
    $region19: #{agnn_efg_forward.5} parent=1 // pred_check_branch
      %20 = sbr.rel (0) target = $region21
    $region20: #{agnn_efg_forward.5} parent=1 // pred_region
      _
    $region21: #{agnn_efg_forward.5} parent=1 // pred_fallthru
      _
    %v21 = vld [vmem:[%s0] sm:$0xf]
    %v22 = vld [vmem:[%s0 + $0x4] sm:$0xf]
    %vm23 = vcmask 1043456
    %v24 = vsel %vm23, %v21, 0.0
    %v25 = vrot.slane %v24, 4
    %v26 = vadd.f32 %v24, %v25
    %v27 = vrot.slane %v26, 2
    %v28 = vadd.f32 %v26, %v27
    %v29 = vrot.slane %v28, 1
    %v30 = vadd.f32 %v28, %v29
    %v31 = vsel %vm23, %v22, 0.0
    %v32 = vrot.slane %v31, 4
    %v33 = vadd.f32 %v31, %v32
    %v34 = vrot.slane %v33, 2
    %v35 = vadd.f32 %v33, %v34
    %v36 = vrot.slane %v35, 1
    %v37 = vadd.f32 %v35, %v36
    %v38 = vld [vmem:[%s1] sm:$0xff]
    %v39 = vld [vmem:[%s1 + $0x8] sm:$0xff]
    %v40 = vld [vmem:[%s1 + $0x10] sm:$0xff]
    %v41 = vld [vmem:[%s1 + $0x18] sm:$0xff]
    %v42 = vld [vmem:[%s1 + $0x20] sm:$0xff]
    %v43 = vld [vmem:[%s1 + $0x28] sm:$0xff]
    %v44 = vld [vmem:[%s1 + $0x30] sm:$0xff]
    %v45 = vld [vmem:[%s1 + $0x38] sm:$0xff]
    %v46 = vld [vmem:[%s1 + $0x40] sm:$0xff]
    %v47 = vld [vmem:[%s1 + $0x48] sm:$0xff]
    %v48 = vld [vmem:[%s1 + $0x50] sm:$0xff]
    %v49 = vld [vmem:[%s1 + $0x58] sm:$0xff]
    %v50 = vld [vmem:[%s1 + $0x60] sm:$0xff]
    %v51 = vld [vmem:[%s1 + $0x68] sm:$0xff]
    %v52 = vld [vmem:[%s1 + $0x70] sm:$0xff]
    %v53 = vld [vmem:[%s1 + $0x78] sm:$0xff]
    %v54 = vld [vmem:[%s2] sm:$0x1]
    %v55 = vmul.f32 %v54, 4.0
    %v57 = vlaneseq
    %v58 = vshrl.u32 %v57, 7
    %v59 = vsub.s32 0, %v58
    %v60 = vrot.slane %v55, %v59
    %vm64 = vcmask 1041409
    %v65 = vsel %vm64, %v37, %v30
    %67 = vmatprep.subr.mxu0 0.0
    %68 = vmatpush1.msra.mxu0 %v38
    %69 = vmatprep.subr.mxu0 0.0
    %70 = vmatpush1.msra.mxu0 %v39
    %71 = vmatprep.subr.mxu0 0.0
    %72 = vmatpush1.msra.mxu0 %v40
    %73 = vmatprep.subr.mxu0 0.0
    %74 = vmatpush1.msra.mxu0 %v41
    %75 = vmatprep.subr.mxu0 0.0
    %76 = vmatpush1.msra.mxu0 %v42
    %77 = vmatprep.subr.mxu0 0.0
    %78 = vmatpush1.msra.mxu0 %v43
    %79 = vmatprep.subr.mxu0 0.0
    %80 = vmatpush1.msra.mxu0 %v44
    %81 = vmatprep.subr.mxu0 0.0
    %82 = vmatpush1.msra.mxu0 %v45
    %83 = vmatprep.subr.mxu0 0.0
    %84 = vmatpush1.msra.mxu0 %v46
    %85 = vmatprep.subr.mxu0 0.0
    %86 = vmatpush1.msra.mxu0 %v47
    %87 = vmatprep.subr.mxu0 0.0
    %88 = vmatpush1.msra.mxu0 %v48
    %89 = vmatprep.subr.mxu0 0.0
    %90 = vmatpush1.msra.mxu0 %v49
    %91 = vmatprep.subr.mxu0 0.0
    %92 = vmatpush1.msra.mxu0 %v50
    %93 = vmatprep.subr.mxu0 0.0
    %94 = vmatpush1.msra.mxu0 %v51
    %95 = vmatprep.subr.mxu0 0.0
    %96 = vmatpush1.msra.mxu0 %v52
    %97 = vmatprep.subr.mxu0 0.0
    %98 = vmatpush1.msra.mxu0 %v53
    %99 = vmatprep.subr.mxu0 0.0
    %100 = vmatpush1.msra.mxu0 0.0
    %101 = vmatprep.subr.mxu0 0.0
    %102 = vmatpush1.msra.mxu0 0.0
    %103 = vmatprep.subr.mxu0 0.0
    %104 = vmatpush1.msra.mxu0 0.0
    %105 = vmatprep.subr.mxu0 0.0
    %106 = vmatpush1.msra.mxu0 0.0
    %107 = vmatprep.subr.mxu0 0.0
    %108 = vmatpush1.msra.mxu0 0.0
    %109 = vmatprep.subr.mxu0 0.0
    %110 = vmatpush1.msra.mxu0 0.0
    %111 = vmatprep.subr.mxu0 0.0
    %112 = vmatpush1.msra.mxu0 0.0
    %113 = vmatprep.subr.mxu0 0.0
    %114 = vmatpush1.msra.mxu0 0.0
    %115 = vmatprep.subr.mxu0 0.0
    %116 = vmatpush1.msra.mxu0 0.0
    %117 = vmatprep.subr.mxu0 0.0
    %118 = vmatpush1.msra.mxu0 0.0
    %119 = vmatprep.subr.mxu0 0.0
    %120 = vmatpush1.msra.mxu0 0.0
    %121 = vmatprep.subr.mxu0 0.0
    %122 = vmatpush1.msra.mxu0 0.0
    %123 = vmatprep.subr.mxu0 0.0
    %124 = vmatpush1.msra.mxu0 0.0
    %125 = vmatprep.subr.mxu0 0.0
    %126 = vmatpush1.msra.mxu0 0.0
    %127 = vmatprep.subr.mxu0 0.0
    %128 = vmatpush1.msra.mxu0 0.0
    %129 = vmatprep.subr.mxu0 0.0
    %130 = vmatpush1.msra.mxu0 0.0
    %131 = vmatprep.mubr.f32.mxu0 0.0
    %132 = vmatmul.mubr.f32.gmra.mrb[0].mxu0 %v65
    %v133 = vpop.f32.mrb[0].mxu0
    %v134 = vadd.f32 %v60, %v133
    %v135 = vpop.f32.mrb[0].mxu0
    %136 = vdwg.mxu0
    %v137 = vld [vmem:[%s3] sm:$0xff]
    %v138 = vld [vmem:[%s3 + $0x8] sm:$0xff]
    %v139 = vld [vmem:[%s3 + $0x10] sm:$0xff]
    %v140 = vld [vmem:[%s3 + $0x18] sm:$0xff]
    %v141 = vld [vmem:[%s3 + $0x20] sm:$0xff]
    %v142 = vld [vmem:[%s3 + $0x28] sm:$0xff]
    %v143 = vld [vmem:[%s3 + $0x30] sm:$0xff]
    %v144 = vld [vmem:[%s3 + $0x38] sm:$0xff]
    %v145 = vld [vmem:[%s3 + $0x40] sm:$0xff]
    %v146 = vld [vmem:[%s3 + $0x48] sm:$0xff]
    %v147 = vld [vmem:[%s3 + $0x50] sm:$0xff]
    %v148 = vld [vmem:[%s3 + $0x58] sm:$0xff]
    %v149 = vld [vmem:[%s3 + $0x60] sm:$0xff]
    %v150 = vld [vmem:[%s3 + $0x68] sm:$0xff]
    %v151 = vld [vmem:[%s3 + $0x70] sm:$0xff]
    %v152 = vld [vmem:[%s3 + $0x78] sm:$0xff]
    %v153 = vld [vmem:[%s4] sm:$0x1]
    %v155 = vlaneseq
    %v156 = vshrl.u32 %v155, 7
    %v157 = vsub.s32 0, %v156
    %v158 = vrot.slane %v153, %v157
    %160 = vmatprep.subr.mxu0 0.0
    %161 = vmatpush1.msra.mxu0 %v137
    %162 = vmatprep.subr.mxu0 0.0
    %163 = vmatpush1.msra.mxu0 %v138
    %164 = vmatprep.subr.mxu0 0.0
    %165 = vmatpush1.msra.mxu0 %v139
    %166 = vmatprep.subr.mxu0 0.0
    %167 = vmatpush1.msra.mxu0 %v140
    %168 = vmatprep.subr.mxu0 0.0
    %169 = vmatpush1.msra.mxu0 %v141
    %170 = vmatprep.subr.mxu0 0.0
    %171 = vmatpush1.msra.mxu0 %v142
    %172 = vmatprep.subr.mxu0 0.0
    %173 = vmatpush1.msra.mxu0 %v143
    %174 = vmatprep.subr.mxu0 0.0
    %175 = vmatpush1.msra.mxu0 %v144
    %176 = vmatprep.subr.mxu0 0.0
    %177 = vmatpush1.msra.mxu0 %v145
    %178 = vmatprep.subr.mxu0 0.0
    %179 = vmatpush1.msra.mxu0 %v146
    %180 = vmatprep.subr.mxu0 0.0
    %181 = vmatpush1.msra.mxu0 %v147
    %182 = vmatprep.subr.mxu0 0.0
    %183 = vmatpush1.msra.mxu0 %v148
    %184 = vmatprep.subr.mxu0 0.0
    %185 = vmatpush1.msra.mxu0 %v149
    %186 = vmatprep.subr.mxu0 0.0
    %187 = vmatpush1.msra.mxu0 %v150
    %188 = vmatprep.subr.mxu0 0.0
    %189 = vmatpush1.msra.mxu0 %v151
    %190 = vmatprep.subr.mxu0 0.0
    %191 = vmatpush1.msra.mxu0 %v152
    %192 = vmatprep.subr.mxu0 0.0
    %193 = vmatpush1.msra.mxu0 0.0
    %194 = vmatprep.subr.mxu0 0.0
    %195 = vmatpush1.msra.mxu0 0.0
    %196 = vmatprep.subr.mxu0 0.0
    %197 = vmatpush1.msra.mxu0 0.0
    %198 = vmatprep.subr.mxu0 0.0
    %199 = vmatpush1.msra.mxu0 0.0
    %200 = vmatprep.subr.mxu0 0.0
    %201 = vmatpush1.msra.mxu0 0.0
    %202 = vmatprep.subr.mxu0 0.0
    %203 = vmatpush1.msra.mxu0 0.0
    %204 = vmatprep.subr.mxu0 0.0
    %205 = vmatpush1.msra.mxu0 0.0
    %206 = vmatprep.subr.mxu0 0.0
    %207 = vmatpush1.msra.mxu0 0.0
    %208 = vmatprep.subr.mxu0 0.0
    %209 = vmatpush1.msra.mxu0 0.0
    %210 = vmatprep.subr.mxu0 0.0
    %211 = vmatpush1.msra.mxu0 0.0
    %212 = vmatprep.subr.mxu0 0.0
    %213 = vmatpush1.msra.mxu0 0.0
    %214 = vmatprep.subr.mxu0 0.0
    %215 = vmatpush1.msra.mxu0 0.0
    %216 = vmatprep.subr.mxu0 0.0
    %217 = vmatpush1.msra.mxu0 0.0
    %218 = vmatprep.subr.mxu0 0.0
    %219 = vmatpush1.msra.mxu0 0.0
    %220 = vmatprep.subr.mxu0 0.0
    %221 = vmatpush1.msra.mxu0 0.0
    %222 = vmatprep.subr.mxu0 0.0
    %223 = vmatpush1.msra.mxu0 0.0
    %224 = vmatprep.mubr.f32.mxu0 0.0
    %225 = vmatmul.mubr.f32.gmra.mrb[0].mxu0 %v134
    %v226 = vpop.f32.mrb[0].mxu0
    %v227 = vadd.f32 %v158, %v226
    %v228 = vpop.f32.mrb[0].mxu0
    %229 = vdwg.mxu0
    %230 = vst [vmem:[#allocation2] sm:$0x3] %v227
    // Predicated region
    $region22: #{agnn_efg_forward.5} parent=1 // pred_check
      _
    $region23: #{agnn_efg_forward.5} parent=1 // pred_check_branch
      %232 = sbr.rel (0) target = $region25
    $region24: #{agnn_efg_forward.5} parent=1 // pred_region
      %s234 = ssub.s32 32, 32
      %235 = vsyncadd [#allocation3], %s234
      %s237 = sshll.u32 [#allocation2], 4
      %s238 = int_to_ptr.vmem [resolvable:$true] %s237
      %240 = dma.vmem_to_hbm [thread:$0]  %s238, 32, %s5, [#allocation3]
    $region25: #{agnn_efg_forward.5} parent=1 // pred_fallthru
      _
    // Predicated region
    $region26: #{agnn_efg_forward.5} parent=1 // pred_check
      _
    $region27: #{agnn_efg_forward.5} parent=1 // pred_check_branch
      %242 = sbr.rel (0) target = $region29
    $region28: #{agnn_efg_forward.5} parent=1 // pred_region
      %243 = dma.done [#allocation3], 32
    $region29: #{agnn_efg_forward.5} parent=1 // pred_fallthru
      _
    %244 = vsyncpa [#allocation3], 1

</llo_original>
